<compile_context>
chip_gen: v6e
topology: v6e:2x2x1
jax: 0.10.0
libtpu: 0.0.40
codegen_flags: <defaults>
</compile_context>

<pallas_src>
import functools

import numpy as np
import jax
import jax.numpy as jnp
from jax import lax
from jax.experimental import pallas as pl
from jax.experimental.pallas import tpu as pltpu


_LANE = 128
_VMEM_TILE_BUDGET = 20 * 2**20      # conservative per-step working-set budget


def _round_up(x, m):
    return ((x + m - 1) // m) * m


def _channel_tile_candidates(cout):
    cands = {cout}
    for t in (8, 16, 32, 64, 128):
        if t < cout and cout % t == 0:
            cands.add(t)
    return sorted(cands, reverse=True)


def _pick_channel_tile(cout, fixed_bytes, per_channel_bytes,
                       budget=_VMEM_TILE_BUDGET):
    """Largest channel tile (mult. of 8, or full Cout) fitting the VMEM budget."""
    cands = _channel_tile_candidates(cout)
    for t in cands:
        if fixed_bytes + t * per_channel_bytes <= budget:
            return t
    return cands[-1]


def _vmem_limit(needed_bytes):
    return int(min(100 * 2**20, needed_bytes + 16 * 2**20))


# ----------------------------------------------------------------------------
# Pallas kernel 1: complex spectral mode mixing
#   out[b, o, m] = sum_i x[b, i, m] * w[i, o, m]   (complex, split into re/im)
# Grid: (B, Cout/co_tile), both parallel.  The flattened mode axis Mpad is
# processed in <=512-lane chunks so the accumulators stay register resident.
# ----------------------------------------------------------------------------
def _spectral_mul_kernel(xr_ref, xi_ref, wr_ref, wi_ref, or_ref, oi_ref,
                         *, m_chunk):
    cin = wr_ref.shape[0]
    mpad = wr_ref.shape[2]
    for c in range(mpad // m_chunk):
        sl = slice(c * m_chunk, (c + 1) * m_chunk)
        acc_r = None
        acc_i = None
        for i in range(cin):                       # Cin tiny & static -> unrolled
            xr_i = xr_ref[0, i:i + 1, sl]          # (1, CH)   sublane broadcast
            xi_i = xi_ref[0, i:i + 1, sl]
            wr_i = wr_ref[i, :, sl]                # (co_tile, CH)
            wi_i = wi_ref[i, :, sl]
            tr = xr_i * wr_i - xi_i * wi_i
            ti = xr_i * wi_i + xi_i * wr_i
            acc_r = tr if acc_r is None else acc_r + tr
            acc_i = ti if acc_i is None else acc_i + ti
        or_ref[0, :, sl] = acc_r                   # store per chunk -> no spill
        oi_ref[0, :, sl] = acc_i


def spectral_mul(xr, xi, wr, wi):
    B, Cin, Mpad = xr.shape
    Cout = wr.shape[1]

    # Per-step (double-buffered) VMEM bookkeeping to pick the Cout tile.
    fixed = 2 * 2 * Cin * Mpad * 4                       # xr + xi blocks
    per_ch = 2 * 2 * Cin * Mpad * 4 + 2 * 2 * Mpad * 4   # wr+wi and out_r+out_i
    co_tile = _pick_channel_tile(Cout, fixed, per_ch)
    nco = Cout // co_tile
    m_chunk = 512 if Mpad % 512 == 0 else (256 if Mpad % 256 == 0 else 128)

    x_spec = pl.BlockSpec((1, Cin, Mpad), lambda b, c: (b, 0, 0))
    w_spec = pl.BlockSpec((Cin, co_tile, Mpad), lambda b, c: (0, c, 0))
    o_spec = pl.BlockSpec((1, co_tile, Mpad), lambda b, c: (b, c, 0))

    return pl.pallas_call(
        functools.partial(_spectral_mul_kernel, m_chunk=m_chunk),
        out_shape=(jax.ShapeDtypeStruct((B, Cout, Mpad), jnp.float32),
                   jax.ShapeDtypeStruct((B, Cout, Mpad), jnp.float32)),
        grid=(B, nco),
        in_specs=[x_spec, x_spec, w_spec, w_spec],
        out_specs=(o_spec, o_spec),
        compiler_params=pltpu.CompilerParams(
            dimension_semantics=("parallel", "parallel"),
            vmem_limit_bytes=_vmem_limit(fixed + co_tile * per_ch)),
    )(xr, xi, wr, wi)


# ----------------------------------------------------------------------------
# Pallas kernel 2: fused  1x1 conv (MXU when Cin>=8, VPU otherwise)
#                  +  add spectral branch
#                  +  InstanceNorm2d (affine, eps=1e-5, two-pass variance)
#                  +  exact (erf) GELU
# All operands are (.., C, P) with the flattened spatial axis P lane-dense.
# ----------------------------------------------------------------------------
def _fused_pointwise_norm_gelu_kernel(x_ref, x1_ref, w_ref, p_ref, o_ref,
                                      *, use_mxu):
    # x_ref : (1, Cin, P)   (bicubic-resized) input, lane-dense
    # x1_ref: (1, Ct,  P)   spectral-branch output tile
    # w_ref : (Ct, Cin)     1x1-conv weight tile
    # p_ref : (3, Ct, 1)    stacked [conv bias; norm gamma; norm beta]
    # o_ref : (1, Ct, P)
    cin = x_ref.shape[1]
    x = x_ref[0]                                            # (Cin, P)
    w = w_ref[...]                                          # (Ct, Cin)
    p = p_ref[...]                                          # (3, Ct, 1)
    bias, gamma, beta = p[0], p[1], p[2]                    # (Ct, 1) each

    if use_mxu:
        # (Ct x Cin) @ (Cin x P): exactly MXU-shaped, P on lanes.
        y = jnp.dot(w, x, preferred_element_type=jnp.float32) + bias
    else:
        # Tiny channel count: unrolled VPU broadcast MACs beat an under-filled MXU.
        y = bias + w[:, 0:1] * x[0:1, :]
        for i in range(1, cin):
            y = y + w[:, i:i + 1] * x[i:i + 1, :]

    s = x1_ref[0] + y                                       # (Ct, P)

    # InstanceNorm2d: two-pass (mean, then centered sum of squares) in f32.
    n = s.shape[-1]
    mean = jnp.sum(s, axis=-1, keepdims=True) * (1.0 / n)
    d = s - mean
    var = jnp.sum(d * d, axis=-1, keepdims=True) * (1.0 / n)   # biased variance
    yn = d * lax.rsqrt(var + 1e-5) * gamma + beta

    # exact (erf-based) GELU, matching torch.nn.functional.gelu default numerics
    o_ref[0] = 0.5 * yn * (1.0 + lax.erf(yn * 0.7071067811865475))


def fused_pointwise_add_norm_gelu(x_rs, x1, conv_w, norm_p):
    B, Cin, P = x_rs.shape
    Cout = conv_w.shape[0]

    fixed = 2 * Cin * P * 4                                  # x_rs block (x2 buf)
    per_ch = 2 * 2 * P * 4 + 2 * Cin * 4 + 2 * 3 * 4         # x1 + out + w + p
    c_tile = _pick_channel_tile(Cout, fixed, per_ch)
    nc = Cout // c_tile
    use_mxu = Cin >= 8

    return pl.pallas_call(
        functools.partial(_fused_pointwise_norm_gelu_kernel, use_mxu=use_mxu),
        out_shape=jax.ShapeDtypeStruct((B, Cout, P), jnp.float32),
        grid=(B, nc),
        in_specs=[
            pl.BlockSpec((1, Cin, P), lambda b, c: (b, 0, 0)),
            pl.BlockSpec((1, c_tile, P), lambda b, c: (b, c, 0)),
            pl.BlockSpec((c_tile, Cin), lambda b, c: (c, 0)),
            pl.BlockSpec((3, c_tile, 1), lambda b, c: (0, c, 0)),
        ],
        out_specs=pl.BlockSpec((1, c_tile, P), lambda b, c: (b, c, 0)),
        compiler_params=pltpu.CompilerParams(
            dimension_semantics=("parallel", "parallel"),
            vmem_limit_bytes=_vmem_limit(fixed + c_tile * per_ch)),
    )(x_rs, x1, conv_w, norm_p)


# ----------------------------------------------------------------------------
# Glue: bicubic (align_corners=True, a=-0.75) interpolation matrix.
# TODO(synk): PyTorch's antialias path (widened cubic kernel) only applies when
#             downsampling; it is not implemented here (enforced by an assert).
# ----------------------------------------------------------------------------
def _cubic_weight(t, A=-0.75):
    t = abs(float(t))
    if t <= 1.0:
        return (A + 2.0) * t ** 3 - (A + 3.0) * t ** 2 + 1.0
    if t < 2.0:
        return A * t ** 3 - 5.0 * A * t ** 2 + 8.0 * A * t - 4.0 * A
    return 0.0


def bicubic_matrix_align_corners(in_size, out_size):
    M = np.zeros((out_size, in_size), dtype=np.float32)
    scale = 0.0 if out_size == 1 else (in_size - 1) / (out_size - 1)
    for j in range(out_size):
        src = j * scale
        f = int(np.floor(src))
        t = src - f
        for k in range(-1, 3):
            idx = min(max(f + k, 0), in_size - 1)
            M[j, idx] += _cubic_weight(k - t)
    return jnp.asarray(M)


# ----------------------------------------------------------------------------
# One-time parameter preparation (hoisted out of the jitted forward).
# ----------------------------------------------------------------------------
def prepare_params(params, *, modes1, modes2):
    w1, w2 = params["w1"], params["w2"]
    Cin, Cout = w1.shape[0], w1.shape[1]
    Mtot = 2 * modes1 * modes2
    Mpad = _round_up(Mtot, _LANE)
    pad = Mpad - Mtot

    w_cat = jnp.concatenate([w1, w2], axis=2)                 # (Cin,Cout,2m1,m2,2)
    wr = w_cat[..., 0].reshape(Cin, Cout, Mtot).astype(jnp.float32)
    wi = w_cat[..., 1].reshape(Cin, Cout, Mtot).astype(jnp.float32)
    if pad:
        wr = jnp.pad(wr, ((0, 0), (0, 0), (0, pad)))
        wi = jnp.pad(wi, ((0, 0), (0, 0), (0, pad)))

    norm_p = jnp.stack([params["conv_b"], params["gamma"], params["beta"]],
                       axis=0).reshape(3, Cout, 1).astype(jnp.float32)
    return {
        "wr": wr, "wi": wi,
        "conv_w": params["conv_w"].astype(jnp.float32),
        "norm_p": norm_p,
        "interp_h": params["interp_h"],
        "interp_w": params["interp_w"],
    }


# ----------------------------------------------------------------------------
# OperatorBlock_2D forward
# ----------------------------------------------------------------------------
def operator_block_2d(x, prep, *, dim1, dim2, modes1, modes2):
    B, Cin, H, W = x.shape
    Cout = prep["conv_w"].shape[0]

    assert 2 * modes1 <= dim1 and modes2 <= dim2 // 2 + 1, "mode scatter overlaps"
    assert modes1 <= H and modes2 <= W // 2 + 1, "modes exceed input spectrum"
    assert dim1 >= H and dim2 >= W, \
        "antialiased bicubic downsampling not implemented (dim1>=H, dim2>=W required)"

    # --- SpectralConv2d_Uno -------------------------------------------------
    # TODO(synk): rfft2/irfft2 have no Pallas equivalent; they stay in XLA.
    x_ft = jnp.fft.rfft2(x, norm="forward")                  # (B, Cin, H, W//2+1)
    top = x_ft[:, :, :modes1, :modes2]
    bot = x_ft[:, :, H - modes1:, :modes2]
    xin = jnp.concatenate([top, bot], axis=2)                 # (B, Cin, 2*m1, m2)

    Mtot = 2 * modes1 * modes2
    Mpad = prep["wr"].shape[-1]
    pad = Mpad - Mtot
    xr = jnp.real(xin).reshape(B, Cin, Mtot).astype(jnp.float32)
    xi = jnp.imag(xin).reshape(B, Cin, Mtot).astype(jnp.float32)
    if pad:
        xr = jnp.pad(xr, ((0, 0), (0, 0), (0, pad)))
        xi = jnp.pad(xi, ((0, 0), (0, 0), (0, pad)))

    out_r, out_i = spectral_mul(xr, xi, prep["wr"], prep["wi"])   # Pallas kernel 1
    out_modes = (out_r[:, :, :Mtot] + 1j * out_i[:, :, :Mtot]).reshape(
        B, Cout, 2 * modes1, modes2)

    out_ft = jnp.zeros((B, Cout, dim1, dim2 // 2 + 1), jnp.complex64)
    out_ft = out_ft.at[:, :, :modes1, :modes2].set(out_modes[:, :, :modes1])
    out_ft = out_ft.at[:, :, dim1 - modes1:, :modes2].set(out_modes[:, :, modes1:])
    x1 = jnp.fft.irfft2(out_ft, s=(dim1, dim2), norm="forward")   # (B,Cout,dim1,dim2)

    # --- Pointwise_op_2D + add + InstanceNorm2d + GELU (fused) --------------
    # Bicubic resize commutes with the 1x1 conv (interp rows sum to 1), so it is
    # applied to the input here and skipped entirely when it is the identity.
    # TODO(synk): the W-axis interp could be fused into the Pallas kernel to
    # save one HBM round trip when (dim1,dim2)!=(H,W); kept in plain JAX here.
    if (dim1, dim2) == (H, W):
        x_rs = x
    else:
        x_rs = jnp.einsum("ph,bchw,qw->bcpq",
                          prep["interp_h"], x, prep["interp_w"])
    x_rs = x_rs.reshape(B, Cin, dim1 * dim2).astype(jnp.float32)   # pure reshape
    x1f = x1.reshape(B, Cout, dim1 * dim2).astype(jnp.float32)

    out = fused_pointwise_add_norm_gelu(                     # Pallas kernel 2
        x_rs, x1f, prep["conv_w"], prep["norm_p"])
    return out.reshape(B, Cout, dim1, dim2)


# ----------------------------------------------------------------------------
# Pure-JAX reference (no Pallas) for a correctness check
# ----------------------------------------------------------------------------
def reference(x, params, dim1, dim2, modes1, modes2):
    B, Cin, H, W = x.shape
    Cout = params["conv_w"].shape[0]
    x_ft = jnp.fft.rfft2(x, norm="forward")
    w1c = params["w1"][..., 0] + 1j * params["w1"][..., 1]
    w2c = params["w2"][..., 0] + 1j * params["w2"][..., 1]
    out_ft = jnp.zeros((B, Cout, dim1, dim2 // 2 + 1), jnp.complex64)
    out_ft = out_ft.at[:, :, :modes1, :modes2].set(
        jnp.einsum("bixy,ioxy->boxy", x_ft[:, :, :modes1, :modes2], w1c))
    out_ft = out_ft.at[:, :, dim1 - modes1:, :modes2].set(
        jnp.einsum("bixy,ioxy->boxy", x_ft[:, :, H - modes1:, :modes2], w2c))
    x1 = jnp.fft.irfft2(out_ft, s=(dim1, dim2), norm="forward")

    y = jnp.einsum("bihw,oi->bohw", x, params["conv_w"]) \
        + params["conv_b"].reshape(1, Cout, 1, 1)
    x2 = jnp.einsum("ph,bchw,qw->bcpq", params["interp_h"], y, params["interp_w"])

    s = x1 + x2
    mean = s.mean(axis=(2, 3), keepdims=True)
    var = ((s - mean) ** 2).mean(axis=(2, 3), keepdims=True)
    xhat = (s - mean) / jnp.sqrt(var + 1e-5)
    yn = xhat * params["gamma"].reshape(1, Cout, 1, 1) \
        + params["beta"].reshape(1, Cout, 1, 1)
    return jax.nn.gelu(yn, approximate=False)


# ----------------------------------------------------------------------------
if __name__ == "__main__":
    B, Cin, Cout = 2, 4, 4
    H = W = 16
    dim1 = dim2 = 16          # output grid == input grid -> bicubic is identity
    modes1, modes2 = 7, 8     # dim1//2 - 1, dim2//2

    key = jax.random.PRNGKey(0)
    k = jax.random.split(key, 8)
    x = jax.random.normal(k[0], (B, Cin, H, W), jnp.float32)

    scale = (1.0 / (2.0 * Cin)) ** 0.5
    params = {
        "w1": scale * jax.random.normal(k[1], (Cin, Cout, modes1, modes2, 2), jnp.float32),
        "w2": scale * jax.random.normal(k[2], (Cin, Cout, modes1, modes2, 2), jnp.float32),
        "conv_w": 0.5 * jax.random.normal(k[3], (Cout, Cin), jnp.float32),
        "conv_b": 0.1 * jax.random.normal(k[4], (Cout,), jnp.float32),
        "gamma": 1.0 + 0.1 * jax.random.normal(k[5], (Cout,), jnp.float32),
        "beta": 0.1 * jax.random.normal(k[6], (Cout,), jnp.float32),
        "interp_h": bicubic_matrix_align_corners(H, dim1),
        "interp_w": bicubic_matrix_align_corners(W, dim2),
    }

    # One-time parameter preparation (outside the jitted forward / rollout loop).
    prep = prepare_params(params, modes1=modes1, modes2=modes2)

    fwd = jax.jit(functools.partial(operator_block_2d, dim1=dim1, dim2=dim2,
                                    modes1=modes1, modes2=modes2))
    out = jax.block_until_ready(fwd(x, prep))

    ref = reference(x, params, dim1, dim2, modes1, modes2)
    np.testing.assert_allclose(np.asarray(out), np.asarray(ref), rtol=1e-4, atol=1e-4)
    print("KERNEL_OK")
</pallas_src>

<mosaic_0001>
module attributes {stable_mosaic.version = 11 : i64} {
  func.func @_spectral_mul_kernel(%arg0: i32, %arg1: i32, %arg2: memref<1x4x128xf32, #tpu.memory_space<vmem>>, %arg3: memref<1x4x128xf32, #tpu.memory_space<vmem>>, %arg4: memref<4x4x128xf32, #tpu.memory_space<vmem>>, %arg5: memref<4x4x128xf32, #tpu.memory_space<vmem>>, %arg6: memref<1x4x128xf32, #tpu.memory_space<vmem>>, %arg7: memref<1x4x128xf32, #tpu.memory_space<vmem>>) attributes {dimension_semantics = [#tpu.dimension_semantics<parallel>, #tpu.dimension_semantics<parallel>], iteration_bounds = array<i64: 2, 1>, scalar_prefetch = 0 : i64, scratch_operands = 0 : i64, tpu.core_type = #tpu.core_type<tc>, window_params = [{transform_indices = @transform_0, window_bounds = array<i64: 1, 4, 128>}, {transform_indices = @transform_1, window_bounds = array<i64: 1, 4, 128>}, {transform_indices = @transform_2, window_bounds = array<i64: 4, 4, 128>}, {transform_indices = @transform_3, window_bounds = array<i64: 4, 4, 128>}, {transform_indices = @transform_4, window_bounds = array<i64: 1, 4, 128>}, {transform_indices = @transform_5, window_bounds = array<i64: 1, 4, 128>}]} {
    %c0 = arith.constant 0 : index
    %c0_0 = arith.constant 0 : index
    %c0_1 = arith.constant 0 : index
    %0 = vector.load %arg2[%c0, %c0_0, %c0_1] : memref<1x4x128xf32, #tpu.memory_space<vmem>>, vector<1x1x128xf32>
    %1 = vector.shape_cast %0 : vector<1x1x128xf32> to vector<1x128xf32>
    %c0_2 = arith.constant 0 : index
    %c0_3 = arith.constant 0 : index
    %c0_4 = arith.constant 0 : index
    %2 = vector.load %arg3[%c0_2, %c0_3, %c0_4] : memref<1x4x128xf32, #tpu.memory_space<vmem>>, vector<1x1x128xf32>
    %3 = vector.shape_cast %2 : vector<1x1x128xf32> to vector<1x128xf32>
    %c0_5 = arith.constant 0 : index
    %c0_6 = arith.constant 0 : index
    %c0_7 = arith.constant 0 : index
    %4 = vector.load %arg4[%c0_5, %c0_6, %c0_7] : memref<4x4x128xf32, #tpu.memory_space<vmem>>, vector<1x4x128xf32>
    %5 = vector.shape_cast %4 : vector<1x4x128xf32> to vector<4x128xf32>
    %c0_8 = arith.constant 0 : index
    %c0_9 = arith.constant 0 : index
    %c0_10 = arith.constant 0 : index
    %6 = vector.load %arg5[%c0_8, %c0_9, %c0_10] : memref<4x4x128xf32, #tpu.memory_space<vmem>>, vector<1x4x128xf32>
    %7 = vector.shape_cast %6 : vector<1x4x128xf32> to vector<4x128xf32>
    %8 = vector.broadcast %1 : vector<1x128xf32> to vector<4x128xf32>
    %9 = arith.mulf %8, %5 : vector<4x128xf32>
    %10 = vector.broadcast %3 : vector<1x128xf32> to vector<4x128xf32>
    %11 = arith.mulf %10, %7 : vector<4x128xf32>
    %12 = arith.subf %9, %11 : vector<4x128xf32>
    %13 = vector.broadcast %1 : vector<1x128xf32> to vector<4x128xf32>
    %14 = arith.mulf %13, %7 : vector<4x128xf32>
    %15 = vector.broadcast %3 : vector<1x128xf32> to vector<4x128xf32>
    %16 = arith.mulf %15, %5 : vector<4x128xf32>
    %17 = arith.addf %14, %16 : vector<4x128xf32>
    %c0_11 = arith.constant 0 : index
    %c1 = arith.constant 1 : index
    %c0_12 = arith.constant 0 : index
    %18 = vector.load %arg2[%c0_11, %c1, %c0_12] : memref<1x4x128xf32, #tpu.memory_space<vmem>>, vector<1x1x128xf32>
    %19 = vector.shape_cast %18 : vector<1x1x128xf32> to vector<1x128xf32>
    %c0_13 = arith.constant 0 : index
    %c1_14 = arith.constant 1 : index
    %c0_15 = arith.constant 0 : index
    %20 = vector.load %arg3[%c0_13, %c1_14, %c0_15] : memref<1x4x128xf32, #tpu.memory_space<vmem>>, vector<1x1x128xf32>
    %21 = vector.shape_cast %20 : vector<1x1x128xf32> to vector<1x128xf32>
    %c1_16 = arith.constant 1 : index
    %c0_17 = arith.constant 0 : index
    %c0_18 = arith.constant 0 : index
    %22 = vector.load %arg4[%c1_16, %c0_17, %c0_18] : memref<4x4x128xf32, #tpu.memory_space<vmem>>, vector<1x4x128xf32>
    %23 = vector.shape_cast %22 : vector<1x4x128xf32> to vector<4x128xf32>
    %c1_19 = arith.constant 1 : index
    %c0_20 = arith.constant 0 : index
    %c0_21 = arith.constant 0 : index
    %24 = vector.load %arg5[%c1_19, %c0_20, %c0_21] : memref<4x4x128xf32, #tpu.memory_space<vmem>>, vector<1x4x128xf32>
    %25 = vector.shape_cast %24 : vector<1x4x128xf32> to vector<4x128xf32>
    %26 = vector.broadcast %19 : vector<1x128xf32> to vector<4x128xf32>
    %27 = arith.mulf %26, %23 : vector<4x128xf32>
    %28 = vector.broadcast %21 : vector<1x128xf32> to vector<4x128xf32>
    %29 = arith.mulf %28, %25 : vector<4x128xf32>
    %30 = arith.subf %27, %29 : vector<4x128xf32>
    %31 = vector.broadcast %19 : vector<1x128xf32> to vector<4x128xf32>
    %32 = arith.mulf %31, %25 : vector<4x128xf32>
    %33 = vector.broadcast %21 : vector<1x128xf32> to vector<4x128xf32>
    %34 = arith.mulf %33, %23 : vector<4x128xf32>
    %35 = arith.addf %32, %34 : vector<4x128xf32>
    %36 = arith.addf %12, %30 : vector<4x128xf32>
    %37 = arith.addf %17, %35 : vector<4x128xf32>
    %c0_22 = arith.constant 0 : index
    %c2 = arith.constant 2 : index
    %c0_23 = arith.constant 0 : index
    %38 = vector.load %arg2[%c0_22, %c2, %c0_23] : memref<1x4x128xf32, #tpu.memory_space<vmem>>, vector<1x1x128xf32>
    %39 = vector.shape_cast %38 : vector<1x1x128xf32> to vector<1x128xf32>
    %c0_24 = arith.constant 0 : index
    %c2_25 = arith.constant 2 : index
    %c0_26 = arith.constant 0 : index
    %40 = vector.load %arg3[%c0_24, %c2_25, %c0_26] : memref<1x4x128xf32, #tpu.memory_space<vmem>>, vector<1x1x128xf32>
    %41 = vector.shape_cast %40 : vector<1x1x128xf32> to vector<1x128xf32>
    %c2_27 = arith.constant 2 : index
    %c0_28 = arith.constant 0 : index
    %c0_29 = arith.constant 0 : index
    %42 = vector.load %arg4[%c2_27, %c0_28, %c0_29] : memref<4x4x128xf32, #tpu.memory_space<vmem>>, vector<1x4x128xf32>
    %43 = vector.shape_cast %42 : vector<1x4x128xf32> to vector<4x128xf32>
    %c2_30 = arith.constant 2 : index
    %c0_31 = arith.constant 0 : index
    %c0_32 = arith.constant 0 : index
    %44 = vector.load %arg5[%c2_30, %c0_31, %c0_32] : memref<4x4x128xf32, #tpu.memory_space<vmem>>, vector<1x4x128xf32>
    %45 = vector.shape_cast %44 : vector<1x4x128xf32> to vector<4x128xf32>
    %46 = vector.broadcast %39 : vector<1x128xf32> to vector<4x128xf32>
    %47 = arith.mulf %46, %43 : vector<4x128xf32>
    %48 = vector.broadcast %41 : vector<1x128xf32> to vector<4x128xf32>
    %49 = arith.mulf %48, %45 : vector<4x128xf32>
    %50 = arith.subf %47, %49 : vector<4x128xf32>
    %51 = vector.broadcast %39 : vector<1x128xf32> to vector<4x128xf32>
    %52 = arith.mulf %51, %45 : vector<4x128xf32>
    %53 = vector.broadcast %41 : vector<1x128xf32> to vector<4x128xf32>
    %54 = arith.mulf %53, %43 : vector<4x128xf32>
    %55 = arith.addf %52, %54 : vector<4x128xf32>
    %56 = arith.addf %36, %50 : vector<4x128xf32>
    %57 = arith.addf %37, %55 : vector<4x128xf32>
    %c0_33 = arith.constant 0 : index
    %c3 = arith.constant 3 : index
    %c0_34 = arith.constant 0 : index
    %58 = vector.load %arg2[%c0_33, %c3, %c0_34] : memref<1x4x128xf32, #tpu.memory_space<vmem>>, vector<1x1x128xf32>
    %59 = vector.shape_cast %58 : vector<1x1x128xf32> to vector<1x128xf32>
    %c0_35 = arith.constant 0 : index
    %c3_36 = arith.constant 3 : index
    %c0_37 = arith.constant 0 : index
    %60 = vector.load %arg3[%c0_35, %c3_36, %c0_37] : memref<1x4x128xf32, #tpu.memory_space<vmem>>, vector<1x1x128xf32>
    %61 = vector.shape_cast %60 : vector<1x1x128xf32> to vector<1x128xf32>
    %c3_38 = arith.constant 3 : index
    %c0_39 = arith.constant 0 : index
    %c0_40 = arith.constant 0 : index
    %62 = vector.load %arg4[%c3_38, %c0_39, %c0_40] : memref<4x4x128xf32, #tpu.memory_space<vmem>>, vector<1x4x128xf32>
    %63 = vector.shape_cast %62 : vector<1x4x128xf32> to vector<4x128xf32>
    %c3_41 = arith.constant 3 : index
    %c0_42 = arith.constant 0 : index
    %c0_43 = arith.constant 0 : index
    %64 = vector.load %arg5[%c3_41, %c0_42, %c0_43] : memref<4x4x128xf32, #tpu.memory_space<vmem>>, vector<1x4x128xf32>
    %65 = vector.shape_cast %64 : vector<1x4x128xf32> to vector<4x128xf32>
    %66 = vector.broadcast %59 : vector<1x128xf32> to vector<4x128xf32>
    %67 = arith.mulf %66, %63 : vector<4x128xf32>
    %68 = vector.broadcast %61 : vector<1x128xf32> to vector<4x128xf32>
    %69 = arith.mulf %68, %65 : vector<4x128xf32>
    %70 = arith.subf %67, %69 : vector<4x128xf32>
    %71 = vector.broadcast %59 : vector<1x128xf32> to vector<4x128xf32>
    %72 = arith.mulf %71, %65 : vector<4x128xf32>
    %73 = vector.broadcast %61 : vector<1x128xf32> to vector<4x128xf32>
    %74 = arith.mulf %73, %63 : vector<4x128xf32>
    %75 = arith.addf %72, %74 : vector<4x128xf32>
    %76 = arith.addf %56, %70 : vector<4x128xf32>
    %77 = arith.addf %57, %75 : vector<4x128xf32>
    %c0_44 = arith.constant 0 : index
    %c0_45 = arith.constant 0 : index
    %c0_46 = arith.constant 0 : index
    %78 = vector.load %arg6[%c0_44, %c0_45, %c0_46] : memref<1x4x128xf32, #tpu.memory_space<vmem>>, vector<1x4x128xf32>
    %79 = vector.shape_cast %78 : vector<1x4x128xf32> to vector<4x128xf32>
    %80 = vector.shape_cast %76 : vector<4x128xf32> to vector<1x4x128xf32>
    tpu.vector_store %arg6[%c0_44, %c0_45, %c0_46], %80 {strides = array<i32>} : memref<1x4x128xf32, #tpu.memory_space<vmem>>, vector<1x4x128xf32>,
    %c0_47 = arith.constant 0 : index
    %c0_48 = arith.constant 0 : index
    %c0_49 = arith.constant 0 : index
    %81 = vector.load %arg7[%c0_47, %c0_48, %c0_49] : memref<1x4x128xf32, #tpu.memory_space<vmem>>, vector<1x4x128xf32>
    %82 = vector.shape_cast %81 : vector<1x4x128xf32> to vector<4x128xf32>
    %83 = vector.shape_cast %77 : vector<4x128xf32> to vector<1x4x128xf32>
    tpu.vector_store %arg7[%c0_47, %c0_48, %c0_49], %83 {strides = array<i32>} : memref<1x4x128xf32, #tpu.memory_space<vmem>>, vector<1x4x128xf32>,
    return
  }
  func.func @transform_0(%arg0: i32, %arg1: i32) -> (i32, i32, i32) {
    %c0_i32 = arith.constant 0 : i32
    %c0_i32_0 = arith.constant 0 : i32
    %c0_i32_1 = arith.constant 0 : i32
    return %arg0, %c0_i32, %c0_i32_0 : i32, i32, i32
  }
  func.func @transform_1(%arg0: i32, %arg1: i32) -> (i32, i32, i32) {
    %c0_i32 = arith.constant 0 : i32
    %c0_i32_0 = arith.constant 0 : i32
    %c0_i32_1 = arith.constant 0 : i32
    return %arg0, %c0_i32, %c0_i32_0 : i32, i32, i32
  }
  func.func @transform_2(%arg0: i32, %arg1: i32) -> (i32, i32, i32) {
    %c0_i32 = arith.constant 0 : i32
    %c0_i32_0 = arith.constant 0 : i32
    %c0_i32_1 = arith.constant 0 : i32
    return %c0_i32, %arg1, %c0_i32_0 : i32, i32, i32
  }
  func.func @transform_3(%arg0: i32, %arg1: i32) -> (i32, i32, i32) {
    %c0_i32 = arith.constant 0 : i32
    %c0_i32_0 = arith.constant 0 : i32
    %c0_i32_1 = arith.constant 0 : i32
    return %c0_i32, %arg1, %c0_i32_0 : i32, i32, i32
  }
  func.func @transform_4(%arg0: i32, %arg1: i32) -> (i32, i32, i32) {
    %c0_i32 = arith.constant 0 : i32
    %c0_i32_0 = arith.constant 0 : i32
    return %arg0, %arg1, %c0_i32 : i32, i32, i32
  }
  func.func @transform_5(%arg0: i32, %arg1: i32) -> (i32, i32, i32) {
    %c0_i32 = arith.constant 0 : i32
    %c0_i32_0 = arith.constant 0 : i32
    return %arg0, %arg1, %c0_i32 : i32, i32, i32
  }
}

module attributes {stable_mosaic.version = 11 : i64} {
  func.func @_fused_pointwise_norm_gelu_kernel(%arg0: i32, %arg1: i32, %arg2: memref<1x4x256xf32, #tpu.memory_space<vmem>>, %arg3: memref<1x4x256xf32, #tpu.memory_space<vmem>>, %arg4: memref<4x4xf32, #tpu.memory_space<vmem>>, %arg5: memref<3x4x1xf32, #tpu.memory_space<vmem>>, %arg6: memref<1x4x256xf32, #tpu.memory_space<vmem>>) attributes {dimension_semantics = [#tpu.dimension_semantics<parallel>, #tpu.dimension_semantics<parallel>], iteration_bounds = array<i64: 2, 1>, scalar_prefetch = 0 : i64, scratch_operands = 0 : i64, tpu.core_type = #tpu.core_type<tc>, window_params = [{transform_indices = @transform_0, window_bounds = array<i64: 1, 4, 256>}, {transform_indices = @transform_1, window_bounds = array<i64: 1, 4, 256>}, {transform_indices = @transform_2, window_bounds = array<i64: 4, 4>}, {transform_indices = @transform_3, window_bounds = array<i64: 3, 4, 1>}, {transform_indices = @transform_4, window_bounds = array<i64: 1, 4, 256>}]} {
    %c0 = arith.constant 0 : index
    %c0_0 = arith.constant 0 : index
    %c0_1 = arith.constant 0 : index
    %0 = vector.load %arg2[%c0, %c0_0, %c0_1] : memref<1x4x256xf32, #tpu.memory_space<vmem>>, vector<1x4x256xf32>
    %1 = vector.shape_cast %0 : vector<1x4x256xf32> to vector<4x256xf32>
    %c0_2 = arith.constant 0 : index
    %c0_3 = arith.constant 0 : index
    %2 = vector.load %arg4[%c0_2, %c0_3] : memref<4x4xf32, #tpu.memory_space<vmem>>, vector<4x4xf32>
    %c0_4 = arith.constant 0 : index
    %c0_5 = arith.constant 0 : index
    %c0_6 = arith.constant 0 : index
    %3 = vector.load %arg5[%c0_4, %c0_5, %c0_6] : memref<3x4x1xf32, #tpu.memory_space<vmem>>, vector<3x4x1xf32>
    %4 = vector.extract_strided_slice %3 {offsets = [0, 0, 0], sizes = [1, 4, 1], strides = [1, 1, 1]} : vector<3x4x1xf32> to vector<1x4x1xf32>
    %5 = vector.shape_cast %4 : vector<1x4x1xf32> to vector<4x1xf32>
    %6 = vector.extract_strided_slice %3 {offsets = [1, 0, 0], sizes = [1, 4, 1], strides = [1, 1, 1]} : vector<3x4x1xf32> to vector<1x4x1xf32>
    %7 = vector.shape_cast %6 : vector<1x4x1xf32> to vector<4x1xf32>
    %8 = vector.extract_strided_slice %3 {offsets = [2, 0, 0], sizes = [1, 4, 1], strides = [1, 1, 1]} : vector<3x4x1xf32> to vector<1x4x1xf32>
    %9 = vector.shape_cast %8 : vector<1x4x1xf32> to vector<4x1xf32>
    %10 = vector.extract_strided_slice %2 {offsets = [0, 0], sizes = [4, 1], strides = [1, 1]} : vector<4x4xf32> to vector<4x1xf32>
    %11 = vector.extract_strided_slice %1 {offsets = [0, 0], sizes = [1, 256], strides = [1, 1]} : vector<4x256xf32> to vector<1x256xf32>
    %12 = vector.broadcast %10 : vector<4x1xf32> to vector<4x256xf32>
    %13 = vector.broadcast %11 : vector<1x256xf32> to vector<4x256xf32>
    %14 = arith.mulf %12, %13 : vector<4x256xf32>
    %15 = vector.broadcast %5 : vector<4x1xf32> to vector<4x256xf32>
    %16 = arith.addf %15, %14 : vector<4x256xf32>
    %17 = vector.extract_strided_slice %2 {offsets = [0, 1], sizes = [4, 1], strides = [1, 1]} : vector<4x4xf32> to vector<4x1xf32>
    %18 = vector.extract_strided_slice %1 {offsets = [1, 0], sizes = [1, 256], strides = [1, 1]} : vector<4x256xf32> to vector<1x256xf32>
    %19 = vector.broadcast %17 : vector<4x1xf32> to vector<4x256xf32>
    %20 = vector.broadcast %18 : vector<1x256xf32> to vector<4x256xf32>
    %21 = arith.mulf %19, %20 : vector<4x256xf32>
    %22 = arith.addf %16, %21 : vector<4x256xf32>
    %23 = vector.extract_strided_slice %2 {offsets = [0, 2], sizes = [4, 1], strides = [1, 1]} : vector<4x4xf32> to vector<4x1xf32>
    %24 = vector.extract_strided_slice %1 {offsets = [2, 0], sizes = [1, 256], strides = [1, 1]} : vector<4x256xf32> to vector<1x256xf32>
    %25 = vector.broadcast %23 : vector<4x1xf32> to vector<4x256xf32>
    %26 = vector.broadcast %24 : vector<1x256xf32> to vector<4x256xf32>
    %27 = arith.mulf %25, %26 : vector<4x256xf32>
    %28 = arith.addf %22, %27 : vector<4x256xf32>
    %29 = vector.extract_strided_slice %2 {offsets = [0, 3], sizes = [4, 1], strides = [1, 1]} : vector<4x4xf32> to vector<4x1xf32>
    %30 = vector.extract_strided_slice %1 {offsets = [3, 0], sizes = [1, 256], strides = [1, 1]} : vector<4x256xf32> to vector<1x256xf32>
    %31 = vector.broadcast %29 : vector<4x1xf32> to vector<4x256xf32>
    %32 = vector.broadcast %30 : vector<1x256xf32> to vector<4x256xf32>
    %33 = arith.mulf %31, %32 : vector<4x256xf32>
    %34 = arith.addf %28, %33 : vector<4x256xf32>
    %c0_7 = arith.constant 0 : index
    %c0_8 = arith.constant 0 : index
    %c0_9 = arith.constant 0 : index
    %35 = vector.load %arg3[%c0_7, %c0_8, %c0_9] : memref<1x4x256xf32, #tpu.memory_space<vmem>>, vector<1x4x256xf32>
    %36 = vector.shape_cast %35 : vector<1x4x256xf32> to vector<4x256xf32>
    %37 = arith.addf %36, %34 : vector<4x256xf32>
    %cst = arith.constant dense<0.000000e+00> : vector<4xf32>
    %38 = vector.multi_reduction <add>, %37, %cst [1] : vector<4x256xf32> to vector<4xf32>
    %39 = vector.shape_cast %38 : vector<4xf32> to vector<4x1xf32>
    %cst_10 = arith.constant 3.906250e-03 : f32
    %40 = vector.broadcast %cst_10 : f32 to vector<4x1xf32>
    %41 = arith.mulf %39, %40 : vector<4x1xf32>
    %42 = vector.broadcast %41 : vector<4x1xf32> to vector<4x256xf32>
    %43 = arith.subf %37, %42 : vector<4x256xf32>
    %44 = arith.mulf %43, %43 : vector<4x256xf32>
    %cst_11 = arith.constant dense<0.000000e+00> : vector<4xf32>
    %45 = vector.multi_reduction <add>, %44, %cst_11 [1] : vector<4x256xf32> to vector<4xf32>
    %46 = vector.shape_cast %45 : vector<4xf32> to vector<4x1xf32>
    %cst_12 = arith.constant 3.906250e-03 : f32
    %47 = vector.broadcast %cst_12 : f32 to vector<4x1xf32>
    %48 = arith.mulf %46, %47 : vector<4x1xf32>
    %cst_13 = arith.constant 9.99999974E-6 : f32
    %49 = vector.broadcast %cst_13 : f32 to vector<4x1xf32>
    %50 = arith.addf %48, %49 : vector<4x1xf32>
    %51 = math.rsqrt %50 : vector<4x1xf32>
    %52 = vector.broadcast %51 : vector<4x1xf32> to vector<4x256xf32>
    %53 = arith.mulf %43, %52 : vector<4x256xf32>
    %54 = vector.broadcast %7 : vector<4x1xf32> to vector<4x256xf32>
    %55 = arith.mulf %53, %54 : vector<4x256xf32>
    %56 = vector.broadcast %9 : vector<4x1xf32> to vector<4x256xf32>
    %57 = arith.addf %55, %56 : vector<4x256xf32>
    %cst_14 = arith.constant 5.000000e-01 : f32
    %58 = vector.broadcast %cst_14 : f32 to vector<4x256xf32>
    %59 = arith.mulf %58, %57 : vector<4x256xf32>
    %cst_15 = arith.constant 0.707106769 : f32
    %60 = vector.broadcast %cst_15 : f32 to vector<4x256xf32>
    %61 = arith.mulf %57, %60 : vector<4x256xf32>
    %62 = math.erf %61 : vector<4x256xf32>
    %cst_16 = arith.constant 1.000000e+00 : f32
    %63 = vector.broadcast %cst_16 : f32 to vector<4x256xf32>
    %64 = arith.addf %63, %62 : vector<4x256xf32>
    %65 = arith.mulf %59, %64 : vector<4x256xf32>
    %c0_17 = arith.constant 0 : index
    %c0_18 = arith.constant 0 : index
    %c0_19 = arith.constant 0 : index
    %66 = vector.load %arg6[%c0_17, %c0_18, %c0_19] : memref<1x4x256xf32, #tpu.memory_space<vmem>>, vector<1x4x256xf32>
    %67 = vector.shape_cast %66 : vector<1x4x256xf32> to vector<4x256xf32>
    %68 = vector.shape_cast %65 : vector<4x256xf32> to vector<1x4x256xf32>
    tpu.vector_store %arg6[%c0_17, %c0_18, %c0_19], %68 {strides = array<i32>} : memref<1x4x256xf32, #tpu.memory_space<vmem>>, vector<1x4x256xf32>,
    return
  }
  func.func @transform_0(%arg0: i32, %arg1: i32) -> (i32, i32, i32) {
    %c0_i32 = arith.constant 0 : i32
    %c0_i32_0 = arith.constant 0 : i32
    %c0_i32_1 = arith.constant 0 : i32
    return %arg0, %c0_i32, %c0_i32_0 : i32, i32, i32
  }
  func.func @transform_1(%arg0: i32, %arg1: i32) -> (i32, i32, i32) {
    %c0_i32 = arith.constant 0 : i32
    %c0_i32_0 = arith.constant 0 : i32
    return %arg0, %arg1, %c0_i32 : i32, i32, i32
  }
  func.func @transform_2(%arg0: i32, %arg1: i32) -> (i32, i32) {
    %c0_i32 = arith.constant 0 : i32
    %c0_i32_0 = arith.constant 0 : i32
    return %arg1, %c0_i32 : i32, i32
  }
  func.func @transform_3(%arg0: i32, %arg1: i32) -> (i32, i32, i32) {
    %c0_i32 = arith.constant 0 : i32
    %c0_i32_0 = arith.constant 0 : i32
    %c0_i32_1 = arith.constant 0 : i32
    return %c0_i32, %arg1, %c0_i32_0 : i32, i32, i32
  }
  func.func @transform_4(%arg0: i32, %arg1: i32) -> (i32, i32, i32) {
    %c0_i32 = arith.constant 0 : i32
    %c0_i32_0 = arith.constant 0 : i32
    return %arg0, %arg1, %c0_i32 : i32, i32, i32
  }
}

</mosaic_0001>

<llo_original>
// kernel: operator_block_2d.2
$region0: #{operator_block_2d.2}
  #allocation0 [shape = 'u32[]', space=smem, size = 0x4, offset = 0x4, fixed_abs, tag = 'smem constant byte address 0x4 - core index']
  #allocation1 [shape = 'u32[144,128]{1,0:T(1,128)}', space=vmem, size = 0x12000, scoped, tag = 'internal scratch']
  %s0 = inlined_call_operand.vmem [shape: f32[2,4,128], index: 0, kind: input, shape index: {}]
  %s1 = inlined_call_operand.vmem [shape: f32[2,4,128], index: 1, kind: input, shape index: {}]
  %s2 = inlined_call_operand.vmem [shape: f32[4,4,128], index: 2, kind: input, shape index: {}]
  %s3 = inlined_call_operand.vmem [shape: f32[4,4,128], index: 3, kind: input, shape index: {}]
  %s4 = inlined_call_operand.vmem [shape: f32[2,4,128], index: 4, kind: output, shape index: {0}]
  %s5 = inlined_call_operand.vmem [shape: f32[2,4,128], index: 5, kind: output, shape index: {1}]
  %6 = xla_tuple %s4, %s5
  %s7 = sld [smem:[#allocation0]]
  $region57: #{operator_block_2d.2} parent=0
    _
  %s9 = ssub.s32 1, %s7
  %s10 = scalar_select 0, %s9, %s7
  loop: start=0, step=1, limit=4
  $region2: #{operator_block_2d.2} parent=0 // loop_pre_header
    _
  $region3: #{operator_block_2d.2} parent=0 // loop_header
    %s12 = sphi 0, %s16
    %p13 = scmp.ge.s32.totalorder %s12, 4
    %s19 = sphi 0, %s31
    %s20 = sphi 0, %s27
    %s21 = sphi 0, %s19
    %s22 = sphi 0, %s20
    %s23 = sphi 0, %s21
    %s24 = sphi 0, %s22
    %s34 = sphi 0, %s36
    %s37 = sphi 0, %s34
    %s38 = sphi 0, %s37
    %s54 = sphi 0, %s38
    %s60 = sphi 0, %s62
    %s63 = sphi 0, %s60
    %s64 = sphi 0, %s63
    %s80 = sphi 0, %s64
    %s86 = sphi 0, %s88
    %s89 = sphi 0, %s86
    %s90 = sphi 0, %s89
    %s106 = sphi 0, %s90
    %s112 = sphi 0, %s114
    %s115 = sphi 0, %s112
    %s116 = sphi 0, %s115
    %s132 = sphi 0, %s116
    %s140 = sphi 0, %s142
    %s143 = sphi 0, %s140
    %s144 = sphi 0, %s143
    %s160 = sphi 0, %s144
    %s168 = sphi 0, %s170
    %s171 = sphi 0, %s168
    %s172 = sphi 0, %s171
    %s188 = sphi 0, %s172
  $region4: #{operator_block_2d.2} parent=0 // loop_header_branch
    %15 = sbr.rel (%p13) target = $region8
  $region5: #{operator_block_2d.2} parent=0 // loop_body
    %s17 = ssub.s32 %s12, 1
    %s18 = ssub.s32 %s12, 2
    %s25 = sadd.s32 1, %s20
    %p26 = scmp.ge.s32.totalorder %s25, 1
    %s27 = scalar_select %p26, 0, %s25
    %s28 = sadd.s32 1, %s19
    %s29 = scalar_select %p26, %s28, %s19
    %p30 = scmp.ge.s32.totalorder %s29, 2
    %s31 = scalar_select %p30, 0, %s29
    %s32 = ssub.s32 %s19, %s31
    %p33 = scmp.eq.s32.totalorder %s32, 0
    %s35 = sadd.s32 %s34, 1
    %s36 = scalar_select %p33, %s34, %s35
    %p39 = pneg %p33
    %p40 = scmp.eq.s32.totalorder %s12, 1
    %p41 = por %p39, %p40
    %p42 = scmp.ne.s32.totalorder %s34, %s37
    %p43 = scmp.eq.s32.totalorder %s12, 0
    %p44 = por %p42, %p43
    %p45 = scmp.ne.s32.totalorder %s34, %s37
    %p46 = scmp.eq.s32.totalorder %s17, 1
    %p47 = por %p45, %p46
    %p48 = scmp.ne.s32.totalorder %s37, %s38
    %p49 = scmp.eq.s32.totalorder %s17, 0
    %p50 = por %p48, %p49
    %p51 = scmp.ne.s32.totalorder %s37, %s38
    %p52 = scmp.eq.s32.totalorder %s18, 1
    %p53 = por %p51, %p52
    %p55 = scmp.ne.s32.totalorder %s38, %s54
    %p56 = scmp.eq.s32.totalorder %s18, 0
    %p57 = por %p55, %p56
    %s58 = ssub.s32 %s19, %s31
    %p59 = scmp.eq.s32.totalorder %s58, 0
    %s61 = sadd.s32 %s60, 1
    %s62 = scalar_select %p59, %s60, %s61
    %p65 = pneg %p59
    %p66 = scmp.eq.s32.totalorder %s12, 1
    %p67 = por %p65, %p66
    %p68 = scmp.ne.s32.totalorder %s60, %s63
    %p69 = scmp.eq.s32.totalorder %s12, 0
    %p70 = por %p68, %p69
    %p71 = scmp.ne.s32.totalorder %s60, %s63
    %p72 = scmp.eq.s32.totalorder %s17, 1
    %p73 = por %p71, %p72
    %p74 = scmp.ne.s32.totalorder %s63, %s64
    %p75 = scmp.eq.s32.totalorder %s17, 0
    %p76 = por %p74, %p75
    %p77 = scmp.ne.s32.totalorder %s63, %s64
    %p78 = scmp.eq.s32.totalorder %s18, 1
    %p79 = por %p77, %p78
    %p81 = scmp.ne.s32.totalorder %s64, %s80
    %p82 = scmp.eq.s32.totalorder %s18, 0
    %p83 = por %p81, %p82
    %s84 = ssub.s32 %s20, %s27
    %p85 = scmp.eq.s32.totalorder %s84, 0
    %s87 = sadd.s32 %s86, 1
    %s88 = scalar_select %p85, %s86, %s87
    %p91 = pneg %p85
    %p92 = scmp.eq.s32.totalorder %s12, 1
    %p93 = por %p91, %p92
    %p94 = scmp.ne.s32.totalorder %s86, %s89
    %p95 = scmp.eq.s32.totalorder %s12, 0
    %p96 = por %p94, %p95
    %p97 = scmp.ne.s32.totalorder %s86, %s89
    %p98 = scmp.eq.s32.totalorder %s17, 1
    %p99 = por %p97, %p98
    %p100 = scmp.ne.s32.totalorder %s89, %s90
    %p101 = scmp.eq.s32.totalorder %s17, 0
    %p102 = por %p100, %p101
    %p103 = scmp.ne.s32.totalorder %s89, %s90
    %p104 = scmp.eq.s32.totalorder %s18, 1
    %p105 = por %p103, %p104
    %p107 = scmp.ne.s32.totalorder %s90, %s106
    %p108 = scmp.eq.s32.totalorder %s18, 0
    %p109 = por %p107, %p108
    %s110 = ssub.s32 %s20, %s27
    %p111 = scmp.eq.s32.totalorder %s110, 0
    %s113 = sadd.s32 %s112, 1
    %s114 = scalar_select %p111, %s112, %s113
    %p117 = pneg %p111
    %p118 = scmp.eq.s32.totalorder %s12, 1
    %p119 = por %p117, %p118
    %p120 = scmp.ne.s32.totalorder %s112, %s115
    %p121 = scmp.eq.s32.totalorder %s12, 0
    %p122 = por %p120, %p121
    %p123 = scmp.ne.s32.totalorder %s112, %s115
    %p124 = scmp.eq.s32.totalorder %s17, 1
    %p125 = por %p123, %p124
    %p126 = scmp.ne.s32.totalorder %s115, %s116
    %p127 = scmp.eq.s32.totalorder %s17, 0
    %p128 = por %p126, %p127
    %p129 = scmp.ne.s32.totalorder %s115, %s116
    %p130 = scmp.eq.s32.totalorder %s18, 1
    %p131 = por %p129, %p130
    %p133 = scmp.ne.s32.totalorder %s116, %s132
    %p134 = scmp.eq.s32.totalorder %s18, 0
    %p135 = por %p133, %p134
    %s136 = ssub.s32 %s19, %s31
    %s137 = ssub.s32 %s20, %s27
    %s138 = sor.u32 %s136, %s137
    %p139 = scmp.eq.s32.totalorder %s138, 0
    %s141 = sadd.s32 %s140, 1
    %s142 = scalar_select %p139, %s140, %s141
    %p145 = pneg %p139
    %p146 = scmp.eq.s32.totalorder %s12, 1
    %p147 = por %p145, %p146
    %p148 = scmp.ne.s32.totalorder %s140, %s143
    %p149 = scmp.eq.s32.totalorder %s12, 0
    %p150 = por %p148, %p149
    %p151 = scmp.ne.s32.totalorder %s140, %s143
    %p152 = scmp.eq.s32.totalorder %s17, 1
    %p153 = por %p151, %p152
    %p154 = scmp.ne.s32.totalorder %s143, %s144
    %p155 = scmp.eq.s32.totalorder %s17, 0
    %p156 = por %p154, %p155
    %p157 = scmp.ne.s32.totalorder %s143, %s144
    %p158 = scmp.eq.s32.totalorder %s18, 1
    %p159 = por %p157, %p158
    %p161 = scmp.ne.s32.totalorder %s144, %s160
    %p162 = scmp.eq.s32.totalorder %s18, 0
    %p163 = por %p161, %p162
    %s164 = ssub.s32 %s19, %s31
    %s165 = ssub.s32 %s20, %s27
    %s166 = sor.u32 %s164, %s165
    %p167 = scmp.eq.s32.totalorder %s166, 0
    %s169 = sadd.s32 %s168, 1
    %s170 = scalar_select %p167, %s168, %s169
    %p173 = pneg %p167
    %p174 = scmp.eq.s32.totalorder %s12, 1
    %p175 = por %p173, %p174
    %p176 = scmp.ne.s32.totalorder %s168, %s171
    %p177 = scmp.eq.s32.totalorder %s12, 0
    %p178 = por %p176, %p177
    %p179 = scmp.ne.s32.totalorder %s168, %s171
    %p180 = scmp.eq.s32.totalorder %s17, 1
    %p181 = por %p179, %p180
    %p182 = scmp.ne.s32.totalorder %s171, %s172
    %p183 = scmp.eq.s32.totalorder %s17, 0
    %p184 = por %p182, %p183
    %p185 = scmp.ne.s32.totalorder %s171, %s172
    %p186 = scmp.eq.s32.totalorder %s18, 1
    %p187 = por %p185, %p186
    %p189 = scmp.ne.s32.totalorder %s172, %s188
    %p190 = scmp.eq.s32.totalorder %s18, 0
    %p191 = por %p189, %p190
    %p192 = scmp.le.s32.totalorder 1, %s12
    %p193 = scmp.lt.s32.totalorder %s12, 3
    %p194 = pnand %p192, %p193
    %p195 = pneg %p194
    // Predicated region
    $region9: #{operator_block_2d.2} parent=5 // pred_check
      _
    $region10: #{operator_block_2d.2} parent=5 // pred_check_branch
      %197 = sbr.rel (%p194) target = $region12
    $region11: #{operator_block_2d.2} parent=5 // pred_region
      %s198 = ssub.s32 %s12, 1
      // Predicated region
      $region13: #{operator_block_2d.2} parent=11 // pred_check
        %p199 = pneg %p102
      $region14: #{operator_block_2d.2} parent=11 // pred_check_branch
        %201 = sbr.rel (%p199) target = $region16
      $region15: #{operator_block_2d.2} parent=11 // pred_region
        %p202 = scmp.lt.s32.totalorder %s22, 0
        %s203 = scalar_select %p202, %s22, 0
        %s204 = smul.addr %s203, 4
        %s205 = scalar_lea.vmem %s2, %s204
      $region16: #{operator_block_2d.2} parent=11 // pred_fallthru
        _
      // Predicated region
      $region17: #{operator_block_2d.2} parent=11 // pred_check
        %p206 = pneg %p128
      $region18: #{operator_block_2d.2} parent=11 // pred_check_branch
        %208 = sbr.rel (%p206) target = $region20
      $region19: #{operator_block_2d.2} parent=11 // pred_region
        %p209 = scmp.lt.s32.totalorder %s22, 0
        %s210 = scalar_select %p209, %s22, 0
        %s211 = smul.addr %s210, 4
        %s212 = scalar_lea.vmem %s3, %s211
      $region20: #{operator_block_2d.2} parent=11 // pred_fallthru
        _
    $region12: #{operator_block_2d.2} parent=5 // pred_fallthru
      _
    %p213 = scmp.lt.s32.totalorder %s12, 2
    // Predicated region
    $region21: #{operator_block_2d.2} parent=5 // pred_check
      %p214 = pneg %p213
    $region22: #{operator_block_2d.2} parent=5 // pred_check_branch
      %216 = sbr.rel (%p214) target = $region24
    $region23: #{operator_block_2d.2} parent=5 // pred_region
      // Predicated region
      $region25: #{operator_block_2d.2} parent=23 // pred_check
        %p217 = pneg %p44
      $region26: #{operator_block_2d.2} parent=23 // pred_check_branch
        %219 = sbr.rel (%p217) target = $region28
      $region27: #{operator_block_2d.2} parent=23 // pred_region
        %p220 = scmp.lt.s32.totalorder %s19, 1
        %s221 = scalar_select %p220, %s19, 1
        %s222 = smul.addr %s221, 4
        %s223 = scalar_lea.vmem %s0, %s222
      $region28: #{operator_block_2d.2} parent=23 // pred_fallthru
        _
      // Predicated region
      $region29: #{operator_block_2d.2} parent=23 // pred_check
        %p224 = pneg %p70
      $region30: #{operator_block_2d.2} parent=23 // pred_check_branch
        %226 = sbr.rel (%p224) target = $region32
      $region31: #{operator_block_2d.2} parent=23 // pred_region
        %p227 = scmp.lt.s32.totalorder %s19, 1
        %s228 = scalar_select %p227, %s19, 1
        %s229 = smul.addr %s228, 4
        %s230 = scalar_lea.vmem %s1, %s229
      $region32: #{operator_block_2d.2} parent=23 // pred_fallthru
        _
    $region24: #{operator_block_2d.2} parent=5 // pred_fallthru
      _
    %p231 = scmp.le.s32.totalorder 1, %s12
    %p232 = scmp.lt.s32.totalorder %s12, 3
    %p233 = pnand %p231, %p232
    %p234 = pneg %p233
    // Predicated region
    $region33: #{operator_block_2d.2} parent=5 // pred_check
      _
    $region34: #{operator_block_2d.2} parent=5 // pred_check_branch
      %236 = sbr.rel (%p233) target = $region36
    $region35: #{operator_block_2d.2} parent=5 // pred_region
      %s237 = ssub.s32 %s12, 1
      %p238 = scmp.lt.s32.totalorder %s21, 1
      %s239 = scalar_select %p238, %s21, 1
      %s240 = smul.addr %s239, 4
      %s241 = scalar_lea.vmem %s0, %s240
      %p242 = pneg %p50
      %p243 = pneg %p47
      %p244 = scmp.lt.s32.totalorder %s21, 1
      %s245 = scalar_select %p244, %s21, 1
      %s246 = smul.addr %s245, 4
      %s247 = scalar_lea.vmem %s1, %s246
      %p248 = pneg %p76
      %p249 = pneg %p73
      %p250 = scmp.lt.s32.totalorder %s22, 0
      %s251 = scalar_select %p250, %s22, 0
      %s252 = smul.addr %s251, 4
      %s253 = scalar_lea.vmem %s2, %s252
      %p254 = pneg %p102
      %p255 = pneg %p99
      %p256 = scmp.lt.s32.totalorder %s22, 0
      %s257 = scalar_select %p256, %s22, 0
      %s258 = smul.addr %s257, 4
      %s259 = scalar_lea.vmem %s3, %s258
      %p260 = pneg %p128
      %p261 = pneg %p125
      %p262 = pneg %p156
      %p263 = pneg %p153
      %p264 = scmp.lt.s32.totalorder %s21, 1
      %s265 = scalar_select %p264, %s21, 1
      %p266 = scmp.lt.s32.totalorder %s22, 0
      %s267 = scalar_select %p266, %s22, 0
      %s268 = sadd.s32 %s267, %s265
      %s269 = smul.addr %s268, 4
      %s270 = scalar_lea.vmem %s4, %s269
      %p271 = pneg %p184
      %p272 = pneg %p181
      %p273 = scmp.lt.s32.totalorder %s21, 1
      %s274 = scalar_select %p273, %s21, 1
      %p275 = scmp.lt.s32.totalorder %s22, 0
      %s276 = scalar_select %p275, %s22, 0
      %s277 = sadd.s32 %s276, %s274
      %s278 = smul.addr %s277, 4
      %s279 = scalar_lea.vmem %s5, %s278
      %p280 = scmp.lt.s32.totalorder %s21, 1
      %s281 = scalar_select %p280, %s21, 1
      %s282 = smul.addr %s281, 4
      %s283 = scalar_lea.vmem %s0, %s282
      %p284 = scmp.lt.s32.totalorder %s21, 1
      %s285 = scalar_select %p284, %s21, 1
      %s286 = smul.addr %s285, 4
      %s287 = scalar_lea.vmem %s1, %s286
      %p288 = scmp.lt.s32.totalorder %s22, 0
      %s289 = scalar_select %p288, %s22, 0
      %s290 = smul.addr %s289, 4
      %s291 = scalar_lea.vmem %s2, %s290
      %p292 = scmp.lt.s32.totalorder %s22, 0
      %s293 = scalar_select %p292, %s22, 0
      %s294 = smul.addr %s293, 4
      %s295 = scalar_lea.vmem %s3, %s294
      %p296 = scmp.lt.s32.totalorder %s21, 1
      %s297 = scalar_select %p296, %s21, 1
      %p298 = scmp.lt.s32.totalorder %s22, 0
      %s299 = scalar_select %p298, %s22, 0
      %s300 = sadd.s32 %s299, %s297
      %s301 = smul.addr %s300, 4
      %s302 = scalar_lea.vmem %s4, %s301
      %p303 = scmp.lt.s32.totalorder %s21, 1
      %s304 = scalar_select %p303, %s21, 1
      %p305 = scmp.lt.s32.totalorder %s22, 0
      %s306 = scalar_select %p305, %s22, 0
      %s307 = sadd.s32 %s306, %s304
      %s308 = smul.addr %s307, 4
      %s309 = scalar_lea.vmem %s5, %s308
      %v310 = vld [vmem:[%s283] sm:$0x1]
      %v311 = vld [vmem:[%s287] sm:$0x1]
      %v312 = vld [vmem:[%s291] sm:$0xf]
      %v313 = vld [vmem:[%s295] sm:$0xf]
      %v314 = vlaneseq
      %v315 = vshrl.u32 %v314, 7
      %v316 = vsub.s32 0, %v315
      %v317 = vrot.slane %v310, %v316
      %v318 = vmul.f32 %v317, %v312
      %v319 = vlaneseq
      %v320 = vshrl.u32 %v319, 7
      %v321 = vsub.s32 0, %v320
      %v322 = vrot.slane %v311, %v321
      %v323 = vmul.f32 %v322, %v313
      %v324 = vsub.f32 %v318, %v323
      %v325 = vmul.f32 %v317, %v313
      %v326 = vmul.f32 %v322, %v312
      %v327 = vadd.f32 %v325, %v326
      %v328 = vld [vmem:[%s283 + $0x1] sm:$0x1]
      %v329 = vld [vmem:[%s287 + $0x1] sm:$0x1]
      %s330 = scalar_lea.vmem %s291, 4
      %v331 = vld [vmem:[%s330] sm:$0xf]
      %s332 = scalar_lea.vmem %s295, 4
      %v333 = vld [vmem:[%s332] sm:$0xf]
      %v334 = vlaneseq
      %v335 = vshrl.u32 %v334, 7
      %v336 = vsub.s32 0, %v335
      %v337 = vrot.slane %v328, %v336
      %v338 = vmul.f32 %v337, %v331
      %v339 = vlaneseq
      %v340 = vshrl.u32 %v339, 7
      %v341 = vsub.s32 0, %v340
      %v342 = vrot.slane %v329, %v341
      %v343 = vmul.f32 %v342, %v333
      %v344 = vsub.f32 %v338, %v343
      %v345 = vmul.f32 %v337, %v333
      %v346 = vmul.f32 %v342, %v331
      %v347 = vadd.f32 %v345, %v346
      %v348 = vadd.f32 %v324, %v344
      %v349 = vadd.f32 %v327, %v347
      %v350 = vld [vmem:[%s283 + $0x2] sm:$0x1]
      %v351 = vld [vmem:[%s287 + $0x2] sm:$0x1]
      %s352 = scalar_lea.vmem %s291, 8
      %v353 = vld [vmem:[%s352] sm:$0xf]
      %s354 = scalar_lea.vmem %s295, 8
      %v355 = vld [vmem:[%s354] sm:$0xf]
      %v356 = vlaneseq
      %v357 = vshrl.u32 %v356, 7
      %v358 = vsub.s32 0, %v357
      %v359 = vrot.slane %v350, %v358
      %v360 = vmul.f32 %v359, %v353
      %v361 = vlaneseq
      %v362 = vshrl.u32 %v361, 7
      %v363 = vsub.s32 0, %v362
      %v364 = vrot.slane %v351, %v363
      %v365 = vmul.f32 %v364, %v355
      %v366 = vsub.f32 %v360, %v365
      %v367 = vmul.f32 %v359, %v355
      %v368 = vmul.f32 %v364, %v353
      %v369 = vadd.f32 %v367, %v368
      %v370 = vadd.f32 %v348, %v366
      %v371 = vadd.f32 %v349, %v369
      %v372 = vld [vmem:[%s283 + $0x3] sm:$0x1]
      %v373 = vld [vmem:[%s287 + $0x3] sm:$0x1]
      %s374 = scalar_lea.vmem %s291, 12
      %v375 = vld [vmem:[%s374] sm:$0xf]
      %s376 = scalar_lea.vmem %s295, 12
      %v377 = vld [vmem:[%s376] sm:$0xf]
      %v378 = vlaneseq
      %v379 = vshrl.u32 %v378, 7
      %v380 = vsub.s32 0, %v379
      %v381 = vrot.slane %v372, %v380
      %v382 = vmul.f32 %v381, %v375
      %v383 = vlaneseq
      %v384 = vshrl.u32 %v383, 7
      %v385 = vsub.s32 0, %v384
      %v386 = vrot.slane %v373, %v385
      %v387 = vmul.f32 %v386, %v377
      %v388 = vsub.f32 %v382, %v387
      %v389 = vmul.f32 %v381, %v377
      %v390 = vmul.f32 %v386, %v375
      %v391 = vadd.f32 %v389, %v390
      %v392 = vadd.f32 %v370, %v388
      %v393 = vadd.f32 %v371, %v391
      %394 = vst [vmem:[%s302] sm:$0xf] %v392
      %395 = vst [vmem:[%s309] sm:$0xf] %v393
      %p396 = scmp.lt.s32.totalorder %s21, 1
      %s397 = scalar_select %p396, %s21, 1
      %p398 = scmp.lt.s32.totalorder %s22, 0
      %s399 = scalar_select %p398, %s22, 0
      %s400 = sadd.s32 %s399, %s397
      %s401 = smul.addr %s400, 4
      %s402 = scalar_lea.vmem %s4, %s401
      %p403 = scmp.lt.s32.totalorder %s21, 1
      %s404 = scalar_select %p403, %s21, 1
      %p405 = scmp.lt.s32.totalorder %s22, 0
      %s406 = scalar_select %p405, %s22, 0
      %s407 = sadd.s32 %s406, %s404
      %s408 = smul.addr %s407, 4
      %s409 = scalar_lea.vmem %s5, %s408
      // Predicated region
      $region37: #{operator_block_2d.2} parent=35 // pred_check
        %p410 = pneg %p153
      $region38: #{operator_block_2d.2} parent=35 // pred_check_branch
        %412 = sbr.rel (%p410) target = $region40
      $region39: #{operator_block_2d.2} parent=35 // pred_region
        _
      $region40: #{operator_block_2d.2} parent=35 // pred_fallthru
        _
      // Predicated region
      $region41: #{operator_block_2d.2} parent=35 // pred_check
        %p413 = pneg %p181
      $region42: #{operator_block_2d.2} parent=35 // pred_check_branch
        %415 = sbr.rel (%p413) target = $region44
      $region43: #{operator_block_2d.2} parent=35 // pred_region
        _
      $region44: #{operator_block_2d.2} parent=35 // pred_fallthru
        _
    $region36: #{operator_block_2d.2} parent=5 // pred_fallthru
      _
    %p416 = scmp.le.s32.totalorder 2, %s12
    // Predicated region
    $region45: #{operator_block_2d.2} parent=5 // pred_check
      %p417 = pneg %p416
    $region46: #{operator_block_2d.2} parent=5 // pred_check_branch
      %419 = sbr.rel (%p417) target = $region48
    $region47: #{operator_block_2d.2} parent=5 // pred_region
      %s420 = ssub.s32 %s12, 2
      // Predicated region
      $region49: #{operator_block_2d.2} parent=47 // pred_check
        %p421 = pneg %p159
      $region50: #{operator_block_2d.2} parent=47 // pred_check_branch
        %423 = sbr.rel (%p421) target = $region52
      $region51: #{operator_block_2d.2} parent=47 // pred_region
        %p424 = scmp.lt.s32.totalorder %s23, 1
        %s425 = scalar_select %p424, %s23, 1
        %p426 = scmp.lt.s32.totalorder %s24, 0
        %s427 = scalar_select %p426, %s24, 0
        %s428 = sadd.s32 %s427, %s425
        %s429 = smul.addr %s428, 4
        %s430 = scalar_lea.vmem %s4, %s429
      $region52: #{operator_block_2d.2} parent=47 // pred_fallthru
        _
      // Predicated region
      $region53: #{operator_block_2d.2} parent=47 // pred_check
        %p431 = pneg %p187
      $region54: #{operator_block_2d.2} parent=47 // pred_check_branch
        %433 = sbr.rel (%p431) target = $region56
      $region55: #{operator_block_2d.2} parent=47 // pred_region
        %p434 = scmp.lt.s32.totalorder %s23, 1
        %s435 = scalar_select %p434, %s23, 1
        %p436 = scmp.lt.s32.totalorder %s24, 0
        %s437 = scalar_select %p436, %s24, 0
        %s438 = sadd.s32 %s437, %s435
        %s439 = smul.addr %s438, 4
        %s440 = scalar_lea.vmem %s5, %s439
      $region56: #{operator_block_2d.2} parent=47 // pred_fallthru
        _
    $region48: #{operator_block_2d.2} parent=5 // pred_fallthru
      _
  $region6: #{operator_block_2d.2} parent=0 // loop_footer
    %s16 = sadd.s32 1, %s12
  $region7: #{operator_block_2d.2} parent=0 // loop_footer_branch
    %11 = sbr.rel target = $region3
  $region8: #{operator_block_2d.2} parent=0 // loop_exit
    _

// kernel: reverse.0
$region0: #{reverse.0}
  %s0 = inlined_call_operand.vmem [shape: f32[2,4,16,7], index: 0, kind: input, shape index: {}]
  %s1 = inlined_call_operand.vmem [shape: f32[2,4,16,7], index: 1, kind: output, shape index: {}]
  $region1: #{reverse.0} parent=0
    #allocation0 [shape = 'u8[65536]{0}', space=vmem, size = 0x10000, scoped, tag = 'operand span for operand 0']
    #allocation1 [shape = 'u8[32768]{0}', space=vmem, size = 0x8000, scoped, tag = 'operand span for operand 1']
    %s2 = scalar_lea.vmem [#allocation0], 8
    // Predicated region
    $region2: #{reverse.0} parent=1 // pred_check
      _
    $region3: #{reverse.0} parent=1 // pred_check_branch
      %4 = sbr.rel (0) target = $region5
    $region4: #{reverse.0} parent=1 // pred_region
      // Predicated region
      $region6: #{reverse.0} parent=4 // pred_check
        _
      $region7: #{reverse.0} parent=4 // pred_check_branch
        %6 = sbr.rel (0) target = $region9
      $region8: #{reverse.0} parent=4 // pred_region
        // Predicated region
        $region21: #{reverse.0} parent=8 // pred_check
          _
        $region22: #{reverse.0} parent=8 // pred_check_branch
          %36 = sbr.rel (0) target = $region24
        $region23: #{reverse.0} parent=8 // pred_region
          loop: start=0, step=1, limit=1
          $region25: #{reverse.0} parent=23 // loop_pre_header
            _
          $region26: #{reverse.0} parent=23 // loop_header
            %s38 = sphi 0, %s42
            %p39 = scmp.ge.s32.totalorder %s38, 1
            %s43 = sphi %s0, %s0
            %s44 = sphi %s2, %s2
          $region27: #{reverse.0} parent=23 // loop_header_branch
            %41 = sbr.rel (%p39) target = $region31
          $region28: #{reverse.0} parent=23 // loop_body
            %v45 = vld [vmem:[%s43] sm:$0xff]
            %46 = vst [vmem:[%s44] sm:$0xff] %v45
            %v47 = vld [vmem:[%s43 + $0x8] sm:$0xff]
            %48 = vst [vmem:[%s44 + $0x10] sm:$0xff] %v47
            %v49 = vld [vmem:[%s43 + $0x10] sm:$0xff]
            %50 = vst [vmem:[%s44 + $0x20] sm:$0xff] %v49
            %v51 = vld [vmem:[%s43 + $0x18] sm:$0xff]
            %52 = vst [vmem:[%s44 + $0x30] sm:$0xff] %v51
            %v53 = vld [vmem:[%s43 + $0x20] sm:$0xff]
            %54 = vst [vmem:[%s44 + $0x40] sm:$0xff] %v53
            %v55 = vld [vmem:[%s43 + $0x28] sm:$0xff]
            %56 = vst [vmem:[%s44 + $0x50] sm:$0xff] %v55
            %v57 = vld [vmem:[%s43 + $0x30] sm:$0xff]
            %58 = vst [vmem:[%s44 + $0x60] sm:$0xff] %v57
            %v59 = vld [vmem:[%s43 + $0x38] sm:$0xff]
            %60 = vst [vmem:[%s44 + $0x70] sm:$0xff] %v59
          $region29: #{reverse.0} parent=23 // loop_footer
            %s42 = sadd.s32 1, %s38
          $region30: #{reverse.0} parent=23 // loop_footer_branch
            %37 = sbr.rel target = $region26
          $region31: #{reverse.0} parent=23 // loop_exit
            _
        $region24: #{reverse.0} parent=8 // pred_fallthru
          _
        // Predicated region
        $region32: #{reverse.0} parent=8 // pred_check
          _
        $region33: #{reverse.0} parent=8 // pred_check_branch
          %62 = sbr.rel target = $region35
        $region34: #{reverse.0} parent=8 // pred_region
          _
        $region35: #{reverse.0} parent=8 // pred_fallthru
          _
      $region9: #{reverse.0} parent=4 // pred_fallthru
        _
      // Predicated region
      $region10: #{reverse.0} parent=4 // pred_check
        _
      $region11: #{reverse.0} parent=4 // pred_check_branch
        %8 = sbr.rel target = $region13
      $region12: #{reverse.0} parent=4 // pred_region
        %s10 = ssub.s32 256, 1
        loop: start=0, step=1, limit=1
        $region14: #{reverse.0} parent=12 // loop_pre_header
          _
        $region15: #{reverse.0} parent=12 // loop_header
          %s12 = sphi 0, %s16
          %p13 = scmp.ge.s32.totalorder %s12, 1
          %s17 = sphi %s0, %s0
          %s18 = sphi %s2, %s2
        $region16: #{reverse.0} parent=12 // loop_header_branch
          %15 = sbr.rel (%p13) target = $region20
        $region17: #{reverse.0} parent=12 // loop_body
          %v19 = vld [vmem:[%s17] sm:%s10]
          %20 = vst [vmem:[%s18] sm:%s10] %v19
          %v21 = vld [vmem:[%s17 + $0x8] sm:%s10]
          %22 = vst [vmem:[%s18 + $0x10] sm:%s10] %v21
          %v23 = vld [vmem:[%s17 + $0x10] sm:%s10]
          %24 = vst [vmem:[%s18 + $0x20] sm:%s10] %v23
          %v25 = vld [vmem:[%s17 + $0x18] sm:%s10]
          %26 = vst [vmem:[%s18 + $0x30] sm:%s10] %v25
          %v27 = vld [vmem:[%s17 + $0x20] sm:%s10]
          %28 = vst [vmem:[%s18 + $0x40] sm:%s10] %v27
          %v29 = vld [vmem:[%s17 + $0x28] sm:%s10]
          %30 = vst [vmem:[%s18 + $0x50] sm:%s10] %v29
          %v31 = vld [vmem:[%s17 + $0x30] sm:%s10]
          %32 = vst [vmem:[%s18 + $0x60] sm:%s10] %v31
          %v33 = vld [vmem:[%s17 + $0x38] sm:%s10]
          %34 = vst [vmem:[%s18 + $0x70] sm:%s10] %v33
        $region18: #{reverse.0} parent=12 // loop_footer
          %s16 = sadd.s32 1, %s12
        $region19: #{reverse.0} parent=12 // loop_footer_branch
          %11 = sbr.rel target = $region15
        $region20: #{reverse.0} parent=12 // loop_exit
          _
      $region13: #{reverse.0} parent=4 // pred_fallthru
        _
    $region5: #{reverse.0} parent=1 // pred_fallthru
      _
    %63 = vnop
    %s64 = scalar_lea.vmem [#allocation0], 7
    %v65 = vld [vmem:[%s64] ss:$-1 sm:$0xff]
    %v66 = vrot.slane %v65, 1
    %67 = vst [vmem:[#allocation1] sm:$0xff] %v66
    %s68 = scalar_lea.vmem [#allocation0], 8
    %s69 = scalar_lea.vmem %s68, 7 [#allocation0]
    %v70 = vld [vmem:[%s69] ss:$-1 sm:$0xff]
    %v71 = vrot.slane %v70, 1
    %v72 = vlaneseq
    %v73 = vshrl.u32 %v72, 7
    %vm74 = vcmp.lt.s32.totalorder %v73, 7
    %75 = vst.msk [vmem:[#allocation1] sm:$0xff] %vm74, %v71
    %s76 = scalar_lea.vmem [#allocation1], 8
    %s77 = scalar_lea.vmem [#allocation0], 16
    %s78 = scalar_lea.vmem %s77, 7 [#allocation0]
    %v79 = vld [vmem:[%s78] ss:$-1 sm:$0xff]
    %v80 = vrot.slane %v79, 1
    %81 = vst [vmem:[%s76] sm:$0xff] %v80
    %s82 = scalar_lea.vmem %s77, 8 [#allocation0]
    %s83 = scalar_lea.vmem %s82, 7 [#allocation0]
    %v84 = vld [vmem:[%s83] ss:$-1 sm:$0xff]
    %v85 = vrot.slane %v84, 1
    %v86 = vlaneseq
    %v87 = vshrl.u32 %v86, 7
    %vm88 = vcmp.lt.s32.totalorder %v87, 7
    %89 = vst.msk [vmem:[%s76] sm:$0xff] %vm88, %v85
    %s90 = scalar_lea.vmem [#allocation1], 16
    %s91 = scalar_lea.vmem [#allocation0], 32
    %s92 = scalar_lea.vmem %s91, 7 [#allocation0]
    %v93 = vld [vmem:[%s92] ss:$-1 sm:$0xff]
    %v94 = vrot.slane %v93, 1
    %95 = vst [vmem:[%s90] sm:$0xff] %v94
    %s96 = scalar_lea.vmem %s91, 8 [#allocation0]
    %s97 = scalar_lea.vmem %s96, 7 [#allocation0]
    %v98 = vld [vmem:[%s97] ss:$-1 sm:$0xff]
    %v99 = vrot.slane %v98, 1
    %v100 = vlaneseq
    %v101 = vshrl.u32 %v100, 7
    %vm102 = vcmp.lt.s32.totalorder %v101, 7
    %103 = vst.msk [vmem:[%s90] sm:$0xff] %vm102, %v99
    %s104 = scalar_lea.vmem [#allocation1], 24
    %s105 = scalar_lea.vmem [#allocation0], 48
    %s106 = scalar_lea.vmem %s105, 7 [#allocation0]
    %v107 = vld [vmem:[%s106] ss:$-1 sm:$0xff]
    %v108 = vrot.slane %v107, 1
    %109 = vst [vmem:[%s104] sm:$0xff] %v108
    %s110 = scalar_lea.vmem %s105, 8 [#allocation0]
    %s111 = scalar_lea.vmem %s110, 7 [#allocation0]
    %v112 = vld [vmem:[%s111] ss:$-1 sm:$0xff]
    %v113 = vrot.slane %v112, 1
    %v114 = vlaneseq
    %v115 = vshrl.u32 %v114, 7
    %vm116 = vcmp.lt.s32.totalorder %v115, 7
    %117 = vst.msk [vmem:[%s104] sm:$0xff] %vm116, %v113
    %s118 = scalar_lea.vmem [#allocation1], 32
    %s119 = scalar_lea.vmem [#allocation0], 64
    %s120 = scalar_lea.vmem %s119, 7 [#allocation0]
    %v121 = vld [vmem:[%s120] ss:$-1 sm:$0xff]
    %v122 = vrot.slane %v121, 1
    %123 = vst [vmem:[%s118] sm:$0xff] %v122
    %s124 = scalar_lea.vmem %s119, 8 [#allocation0]
    %s125 = scalar_lea.vmem %s124, 7 [#allocation0]
    %v126 = vld [vmem:[%s125] ss:$-1 sm:$0xff]
    %v127 = vrot.slane %v126, 1
    %v128 = vlaneseq
    %v129 = vshrl.u32 %v128, 7
    %vm130 = vcmp.lt.s32.totalorder %v129, 7
    %131 = vst.msk [vmem:[%s118] sm:$0xff] %vm130, %v127
    %s132 = scalar_lea.vmem [#allocation1], 40
    %s133 = scalar_lea.vmem [#allocation0], 80
    %s134 = scalar_lea.vmem %s133, 7 [#allocation0]
    %v135 = vld [vmem:[%s134] ss:$-1 sm:$0xff]
    %v136 = vrot.slane %v135, 1
    %137 = vst [vmem:[%s132] sm:$0xff] %v136
    %s138 = scalar_lea.vmem %s133, 8 [#allocation0]
    %s139 = scalar_lea.vmem %s138, 7 [#allocation0]
    %v140 = vld [vmem:[%s139] ss:$-1 sm:$0xff]
    %v141 = vrot.slane %v140, 1
    %v142 = vlaneseq
    %v143 = vshrl.u32 %v142, 7
    %vm144 = vcmp.lt.s32.totalorder %v143, 7
    %145 = vst.msk [vmem:[%s132] sm:$0xff] %vm144, %v141
    %s146 = scalar_lea.vmem [#allocation1], 48
    %s147 = scalar_lea.vmem [#allocation0], 96
    %s148 = scalar_lea.vmem %s147, 7 [#allocation0]
    %v149 = vld [vmem:[%s148] ss:$-1 sm:$0xff]
    %v150 = vrot.slane %v149, 1
    %151 = vst [vmem:[%s146] sm:$0xff] %v150
    %s152 = scalar_lea.vmem %s147, 8 [#allocation0]
    %s153 = scalar_lea.vmem %s152, 7 [#allocation0]
    %v154 = vld [vmem:[%s153] ss:$-1 sm:$0xff]
    %v155 = vrot.slane %v154, 1
    %v156 = vlaneseq
    %v157 = vshrl.u32 %v156, 7
    %vm158 = vcmp.lt.s32.totalorder %v157, 7
    %159 = vst.msk [vmem:[%s146] sm:$0xff] %vm158, %v155
    %s160 = scalar_lea.vmem [#allocation1], 56
    %s161 = scalar_lea.vmem [#allocation0], 112
    %s162 = scalar_lea.vmem %s161, 7 [#allocation0]
    %v163 = vld [vmem:[%s162] ss:$-1 sm:$0xff]
    %v164 = vrot.slane %v163, 1
    %165 = vst [vmem:[%s160] sm:$0xff] %v164
    %s166 = scalar_lea.vmem %s161, 8 [#allocation0]
    %s167 = scalar_lea.vmem %s166, 7 [#allocation0]
    %v168 = vld [vmem:[%s167] ss:$-1 sm:$0xff]
    %v169 = vrot.slane %v168, 1
    %v170 = vlaneseq
    %v171 = vshrl.u32 %v170, 7
    %vm172 = vcmp.lt.s32.totalorder %v171, 7
    %173 = vst.msk [vmem:[%s160] sm:$0xff] %vm172, %v169
    // Predicated region
    $region36: #{reverse.0} parent=1 // pred_check
      _
    $region37: #{reverse.0} parent=1 // pred_check_branch
      %175 = sbr.rel (0) target = $region39
    $region38: #{reverse.0} parent=1 // pred_region
      // Predicated region
      $region40: #{reverse.0} parent=38 // pred_check
        _
      $region41: #{reverse.0} parent=38 // pred_check_branch
        %177 = sbr.rel (0) target = $region43
      $region42: #{reverse.0} parent=38 // pred_region
        // Predicated region
        $region55: #{reverse.0} parent=42 // pred_check
          _
        $region56: #{reverse.0} parent=42 // pred_check_branch
          %207 = sbr.rel (0) target = $region58
        $region57: #{reverse.0} parent=42 // pred_region
          loop: start=0, step=1, limit=1
          $region59: #{reverse.0} parent=57 // loop_pre_header
            _
          $region60: #{reverse.0} parent=57 // loop_header
            %s209 = sphi 0, %s213
            %p210 = scmp.ge.s32.totalorder %s209, 1
            %s214 = sphi [#allocation1], [#allocation1]
            %s215 = sphi %s1, %s1
          $region61: #{reverse.0} parent=57 // loop_header_branch
            %212 = sbr.rel (%p210) target = $region65
          $region62: #{reverse.0} parent=57 // loop_body
            %v216 = vld [vmem:[%s214] sm:$0xff]
            %217 = vst [vmem:[%s215] sm:$0xff] %v216
            %v218 = vld [vmem:[%s214 + $0x8] sm:$0xff]
            %219 = vst [vmem:[%s215 + $0x8] sm:$0xff] %v218
            %v220 = vld [vmem:[%s214 + $0x10] sm:$0xff]
            %221 = vst [vmem:[%s215 + $0x10] sm:$0xff] %v220
            %v222 = vld [vmem:[%s214 + $0x18] sm:$0xff]
            %223 = vst [vmem:[%s215 + $0x18] sm:$0xff] %v222
            %v224 = vld [vmem:[%s214 + $0x20] sm:$0xff]
            %225 = vst [vmem:[%s215 + $0x20] sm:$0xff] %v224
            %v226 = vld [vmem:[%s214 + $0x28] sm:$0xff]
            %227 = vst [vmem:[%s215 + $0x28] sm:$0xff] %v226
            %v228 = vld [vmem:[%s214 + $0x30] sm:$0xff]
            %229 = vst [vmem:[%s215 + $0x30] sm:$0xff] %v228
            %v230 = vld [vmem:[%s214 + $0x38] sm:$0xff]
            %231 = vst [vmem:[%s215 + $0x38] sm:$0xff] %v230
          $region63: #{reverse.0} parent=57 // loop_footer
            %s213 = sadd.s32 1, %s209
          $region64: #{reverse.0} parent=57 // loop_footer_branch
            %208 = sbr.rel target = $region60
          $region65: #{reverse.0} parent=57 // loop_exit
            _
        $region58: #{reverse.0} parent=42 // pred_fallthru
          _
        // Predicated region
        $region66: #{reverse.0} parent=42 // pred_check
          _
        $region67: #{reverse.0} parent=42 // pred_check_branch
          %233 = sbr.rel target = $region69
        $region68: #{reverse.0} parent=42 // pred_region
          _
        $region69: #{reverse.0} parent=42 // pred_fallthru
          _
      $region43: #{reverse.0} parent=38 // pred_fallthru
        _
      // Predicated region
      $region44: #{reverse.0} parent=38 // pred_check
        _
      $region45: #{reverse.0} parent=38 // pred_check_branch
        %179 = sbr.rel target = $region47
      $region46: #{reverse.0} parent=38 // pred_region
        %s181 = ssub.s32 256, 1
        loop: start=0, step=1, limit=1
        $region48: #{reverse.0} parent=46 // loop_pre_header
          _
        $region49: #{reverse.0} parent=46 // loop_header
          %s183 = sphi 0, %s187
          %p184 = scmp.ge.s32.totalorder %s183, 1
          %s188 = sphi [#allocation1], [#allocation1]
          %s189 = sphi %s1, %s1
        $region50: #{reverse.0} parent=46 // loop_header_branch
          %186 = sbr.rel (%p184) target = $region54
        $region51: #{reverse.0} parent=46 // loop_body
          %v190 = vld [vmem:[%s188] sm:%s181]
          %191 = vst [vmem:[%s189] sm:%s181] %v190
          %v192 = vld [vmem:[%s188 + $0x8] sm:%s181]
          %193 = vst [vmem:[%s189 + $0x8] sm:%s181] %v192
          %v194 = vld [vmem:[%s188 + $0x10] sm:%s181]
          %195 = vst [vmem:[%s189 + $0x10] sm:%s181] %v194
          %v196 = vld [vmem:[%s188 + $0x18] sm:%s181]
          %197 = vst [vmem:[%s189 + $0x18] sm:%s181] %v196
          %v198 = vld [vmem:[%s188 + $0x20] sm:%s181]
          %199 = vst [vmem:[%s189 + $0x20] sm:%s181] %v198
          %v200 = vld [vmem:[%s188 + $0x28] sm:%s181]
          %201 = vst [vmem:[%s189 + $0x28] sm:%s181] %v200
          %v202 = vld [vmem:[%s188 + $0x30] sm:%s181]
          %203 = vst [vmem:[%s189 + $0x30] sm:%s181] %v202
          %v204 = vld [vmem:[%s188 + $0x38] sm:%s181]
          %205 = vst [vmem:[%s189 + $0x38] sm:%s181] %v204
        $region52: #{reverse.0} parent=46 // loop_footer
          %s187 = sadd.s32 1, %s183
        $region53: #{reverse.0} parent=46 // loop_footer_branch
          %182 = sbr.rel target = $region49
        $region54: #{reverse.0} parent=46 // loop_exit
          _
      $region47: #{reverse.0} parent=38 // pred_fallthru
        _
    $region39: #{reverse.0} parent=1 // pred_fallthru
      _
    %234 = vnop

// kernel: operator_block_2d.3
$region0: #{operator_block_2d.3}
  #allocation0 [shape = 'u32[]', space=smem, size = 0x4, offset = 0x4, fixed_abs, tag = 'smem constant byte address 0x4 - core index']
  #allocation1 [shape = 'u32[144,128]{1,0:T(1,128)}', space=vmem, size = 0x12000, scoped, tag = 'internal scratch']
  %s0 = inlined_call_operand.vmem [shape: f32[2,4,256], index: 0, kind: input, shape index: {}]
  %s1 = inlined_call_operand.vmem [shape: f32[2,4,256], index: 1, kind: input, shape index: {}]
  %s2 = inlined_call_operand.vmem [shape: f32[4,4], index: 2, kind: input, shape index: {}]
  %s3 = inlined_call_operand.vmem [shape: f32[3,4,1], index: 3, kind: input, shape index: {}]
  %s4 = inlined_call_operand.vmem [shape: f32[2,4,256], index: 4, kind: output, shape index: {}]
  %s5 = sld [smem:[#allocation0]]
  $region49: #{operator_block_2d.3} parent=0
    _
  %s7 = ssub.s32 1, %s5
  %s8 = scalar_select 0, %s7, %s5
  loop: start=0, step=1, limit=4
  $region2: #{operator_block_2d.3} parent=0 // loop_pre_header
    _
  $region3: #{operator_block_2d.3} parent=0 // loop_header
    %s10 = sphi 0, %s14
    %p11 = scmp.ge.s32.totalorder %s10, 4
    %s17 = sphi 0, %s29
    %s18 = sphi 0, %s25
    %s19 = sphi 0, %s17
    %s20 = sphi 0, %s18
    %s21 = sphi 0, %s19
    %s22 = sphi 0, %s20
    %s32 = sphi 0, %s34
    %s35 = sphi 0, %s32
    %s36 = sphi 0, %s35
    %s52 = sphi 0, %s36
    %s60 = sphi 0, %s62
    %s63 = sphi 0, %s60
    %s64 = sphi 0, %s63
    %s80 = sphi 0, %s64
    %s86 = sphi 0, %s88
    %s89 = sphi 0, %s86
    %s90 = sphi 0, %s89
    %s106 = sphi 0, %s90
    %s112 = sphi 0, %s114
    %s115 = sphi 0, %s112
    %s116 = sphi 0, %s115
    %s132 = sphi 0, %s116
    %s140 = sphi 0, %s142
    %s143 = sphi 0, %s140
    %s144 = sphi 0, %s143
    %s160 = sphi 0, %s144
  $region4: #{operator_block_2d.3} parent=0 // loop_header_branch
    %13 = sbr.rel (%p11) target = $region8
  $region5: #{operator_block_2d.3} parent=0 // loop_body
    %s15 = ssub.s32 %s10, 1
    %s16 = ssub.s32 %s10, 2
    %s23 = sadd.s32 1, %s18
    %p24 = scmp.ge.s32.totalorder %s23, 1
    %s25 = scalar_select %p24, 0, %s23
    %s26 = sadd.s32 1, %s17
    %s27 = scalar_select %p24, %s26, %s17
    %p28 = scmp.ge.s32.totalorder %s27, 2
    %s29 = scalar_select %p28, 0, %s27
    %s30 = ssub.s32 %s17, %s29
    %p31 = scmp.eq.s32.totalorder %s30, 0
    %s33 = sadd.s32 %s32, 1
    %s34 = scalar_select %p31, %s32, %s33
    %p37 = pneg %p31
    %p38 = scmp.eq.s32.totalorder %s10, 1
    %p39 = por %p37, %p38
    %p40 = scmp.ne.s32.totalorder %s32, %s35
    %p41 = scmp.eq.s32.totalorder %s10, 0
    %p42 = por %p40, %p41
    %p43 = scmp.ne.s32.totalorder %s32, %s35
    %p44 = scmp.eq.s32.totalorder %s15, 1
    %p45 = por %p43, %p44
    %p46 = scmp.ne.s32.totalorder %s35, %s36
    %p47 = scmp.eq.s32.totalorder %s15, 0
    %p48 = por %p46, %p47
    %p49 = scmp.ne.s32.totalorder %s35, %s36
    %p50 = scmp.eq.s32.totalorder %s16, 1
    %p51 = por %p49, %p50
    %p53 = scmp.ne.s32.totalorder %s36, %s52
    %p54 = scmp.eq.s32.totalorder %s16, 0
    %p55 = por %p53, %p54
    %s56 = ssub.s32 %s17, %s29
    %s57 = ssub.s32 %s18, %s25
    %s58 = sor.u32 %s56, %s57
    %p59 = scmp.eq.s32.totalorder %s58, 0
    %s61 = sadd.s32 %s60, 1
    %s62 = scalar_select %p59, %s60, %s61
    %p65 = pneg %p59
    %p66 = scmp.eq.s32.totalorder %s10, 1
    %p67 = por %p65, %p66
    %p68 = scmp.ne.s32.totalorder %s60, %s63
    %p69 = scmp.eq.s32.totalorder %s10, 0
    %p70 = por %p68, %p69
    %p71 = scmp.ne.s32.totalorder %s60, %s63
    %p72 = scmp.eq.s32.totalorder %s15, 1
    %p73 = por %p71, %p72
    %p74 = scmp.ne.s32.totalorder %s63, %s64
    %p75 = scmp.eq.s32.totalorder %s15, 0
    %p76 = por %p74, %p75
    %p77 = scmp.ne.s32.totalorder %s63, %s64
    %p78 = scmp.eq.s32.totalorder %s16, 1
    %p79 = por %p77, %p78
    %p81 = scmp.ne.s32.totalorder %s64, %s80
    %p82 = scmp.eq.s32.totalorder %s16, 0
    %p83 = por %p81, %p82
    %s84 = ssub.s32 %s18, %s25
    %p85 = scmp.eq.s32.totalorder %s84, 0
    %s87 = sadd.s32 %s86, 1
    %s88 = scalar_select %p85, %s86, %s87
    %p91 = pneg %p85
    %p92 = scmp.eq.s32.totalorder %s10, 1
    %p93 = por %p91, %p92
    %p94 = scmp.ne.s32.totalorder %s86, %s89
    %p95 = scmp.eq.s32.totalorder %s10, 0
    %p96 = por %p94, %p95
    %p97 = scmp.ne.s32.totalorder %s86, %s89
    %p98 = scmp.eq.s32.totalorder %s15, 1
    %p99 = por %p97, %p98
    %p100 = scmp.ne.s32.totalorder %s89, %s90
    %p101 = scmp.eq.s32.totalorder %s15, 0
    %p102 = por %p100, %p101
    %p103 = scmp.ne.s32.totalorder %s89, %s90
    %p104 = scmp.eq.s32.totalorder %s16, 1
    %p105 = por %p103, %p104
    %p107 = scmp.ne.s32.totalorder %s90, %s106
    %p108 = scmp.eq.s32.totalorder %s16, 0
    %p109 = por %p107, %p108
    %s110 = ssub.s32 %s18, %s25
    %p111 = scmp.eq.s32.totalorder %s110, 0
    %s113 = sadd.s32 %s112, 1
    %s114 = scalar_select %p111, %s112, %s113
    %p117 = pneg %p111
    %p118 = scmp.eq.s32.totalorder %s10, 1
    %p119 = por %p117, %p118
    %p120 = scmp.ne.s32.totalorder %s112, %s115
    %p121 = scmp.eq.s32.totalorder %s10, 0
    %p122 = por %p120, %p121
    %p123 = scmp.ne.s32.totalorder %s112, %s115
    %p124 = scmp.eq.s32.totalorder %s15, 1
    %p125 = por %p123, %p124
    %p126 = scmp.ne.s32.totalorder %s115, %s116
    %p127 = scmp.eq.s32.totalorder %s15, 0
    %p128 = por %p126, %p127
    %p129 = scmp.ne.s32.totalorder %s115, %s116
    %p130 = scmp.eq.s32.totalorder %s16, 1
    %p131 = por %p129, %p130
    %p133 = scmp.ne.s32.totalorder %s116, %s132
    %p134 = scmp.eq.s32.totalorder %s16, 0
    %p135 = por %p133, %p134
    %s136 = ssub.s32 %s17, %s29
    %s137 = ssub.s32 %s18, %s25
    %s138 = sor.u32 %s136, %s137
    %p139 = scmp.eq.s32.totalorder %s138, 0
    %s141 = sadd.s32 %s140, 1
    %s142 = scalar_select %p139, %s140, %s141
    %p145 = pneg %p139
    %p146 = scmp.eq.s32.totalorder %s10, 1
    %p147 = por %p145, %p146
    %p148 = scmp.ne.s32.totalorder %s140, %s143
    %p149 = scmp.eq.s32.totalorder %s10, 0
    %p150 = por %p148, %p149
    %p151 = scmp.ne.s32.totalorder %s140, %s143
    %p152 = scmp.eq.s32.totalorder %s15, 1
    %p153 = por %p151, %p152
    %p154 = scmp.ne.s32.totalorder %s143, %s144
    %p155 = scmp.eq.s32.totalorder %s15, 0
    %p156 = por %p154, %p155
    %p157 = scmp.ne.s32.totalorder %s143, %s144
    %p158 = scmp.eq.s32.totalorder %s16, 1
    %p159 = por %p157, %p158
    %p161 = scmp.ne.s32.totalorder %s144, %s160
    %p162 = scmp.eq.s32.totalorder %s16, 0
    %p163 = por %p161, %p162
    %p164 = scmp.le.s32.totalorder 1, %s10
    %p165 = scmp.lt.s32.totalorder %s10, 3
    %p166 = pnand %p164, %p165
    %p167 = pneg %p166
    // Predicated region
    $region9: #{operator_block_2d.3} parent=5 // pred_check
      _
    $region10: #{operator_block_2d.3} parent=5 // pred_check_branch
      %169 = sbr.rel (%p166) target = $region12
    $region11: #{operator_block_2d.3} parent=5 // pred_region
      %s170 = ssub.s32 %s10, 1
      // Predicated region
      $region13: #{operator_block_2d.3} parent=11 // pred_check
        %p171 = pneg %p102
      $region14: #{operator_block_2d.3} parent=11 // pred_check_branch
        %173 = sbr.rel (%p171) target = $region16
      $region15: #{operator_block_2d.3} parent=11 // pred_region
        %p174 = scmp.lt.s32.totalorder %s20, 0
        %s175 = scalar_select %p174, %s20, 0
        %s176 = smul.addr %s175, 4
        %s177 = scalar_lea.vmem %s2, %s176
      $region16: #{operator_block_2d.3} parent=11 // pred_fallthru
        _
      // Predicated region
      $region17: #{operator_block_2d.3} parent=11 // pred_check
        %p178 = pneg %p128
      $region18: #{operator_block_2d.3} parent=11 // pred_check_branch
        %180 = sbr.rel (%p178) target = $region20
      $region19: #{operator_block_2d.3} parent=11 // pred_region
        %p181 = scmp.lt.s32.totalorder %s20, 0
        %s182 = scalar_select %p181, %s20, 0
        %s183 = smul.addr %s182, 4
        %s184 = scalar_lea.vmem %s3, %s183
      $region20: #{operator_block_2d.3} parent=11 // pred_fallthru
        _
    $region12: #{operator_block_2d.3} parent=5 // pred_fallthru
      _
    %p185 = scmp.lt.s32.totalorder %s10, 2
    // Predicated region
    $region21: #{operator_block_2d.3} parent=5 // pred_check
      %p186 = pneg %p185
    $region22: #{operator_block_2d.3} parent=5 // pred_check_branch
      %188 = sbr.rel (%p186) target = $region24
    $region23: #{operator_block_2d.3} parent=5 // pred_region
      // Predicated region
      $region25: #{operator_block_2d.3} parent=23 // pred_check
        %p189 = pneg %p42
      $region26: #{operator_block_2d.3} parent=23 // pred_check_branch
        %191 = sbr.rel (%p189) target = $region28
      $region27: #{operator_block_2d.3} parent=23 // pred_region
        %p192 = scmp.lt.s32.totalorder %s17, 1
        %s193 = scalar_select %p192, %s17, 1
        %s194 = smul.addr %s193, 2
        %s195 = smul.addr %s194, 4
        %s196 = scalar_lea.vmem %s0, %s195
      $region28: #{operator_block_2d.3} parent=23 // pred_fallthru
        _
      // Predicated region
      $region29: #{operator_block_2d.3} parent=23 // pred_check
        %p197 = pneg %p70
      $region30: #{operator_block_2d.3} parent=23 // pred_check_branch
        %199 = sbr.rel (%p197) target = $region32
      $region31: #{operator_block_2d.3} parent=23 // pred_region
        %p200 = scmp.lt.s32.totalorder %s17, 1
        %s201 = scalar_select %p200, %s17, 1
        %p202 = scmp.lt.s32.totalorder %s18, 0
        %s203 = scalar_select %p202, %s18, 0
        %s204 = smul.addr %s203, 2
        %s205 = smul.addr %s201, 2
        %s206 = sadd.s32 %s204, %s205
        %s207 = smul.addr %s206, 4
        %s208 = scalar_lea.vmem %s1, %s207
      $region32: #{operator_block_2d.3} parent=23 // pred_fallthru
        _
    $region24: #{operator_block_2d.3} parent=5 // pred_fallthru
      _
    %p209 = scmp.le.s32.totalorder 1, %s10
    %p210 = scmp.lt.s32.totalorder %s10, 3
    %p211 = pnand %p209, %p210
    %p212 = pneg %p211
    // Predicated region
    $region33: #{operator_block_2d.3} parent=5 // pred_check
      _
    $region34: #{operator_block_2d.3} parent=5 // pred_check_branch
      %214 = sbr.rel (%p211) target = $region36
    $region35: #{operator_block_2d.3} parent=5 // pred_region
      %s215 = ssub.s32 %s10, 1
      %p216 = scmp.lt.s32.totalorder %s19, 1
      %s217 = scalar_select %p216, %s19, 1
      %s218 = smul.addr %s217, 2
      %s219 = smul.addr %s218, 4
      %s220 = scalar_lea.vmem %s0, %s219
      %p221 = pneg %p48
      %p222 = pneg %p45
      %p223 = scmp.lt.s32.totalorder %s19, 1
      %s224 = scalar_select %p223, %s19, 1
      %p225 = scmp.lt.s32.totalorder %s20, 0
      %s226 = scalar_select %p225, %s20, 0
      %s227 = smul.addr %s226, 2
      %s228 = smul.addr %s224, 2
      %s229 = sadd.s32 %s227, %s228
      %s230 = smul.addr %s229, 4
      %s231 = scalar_lea.vmem %s1, %s230
      %p232 = pneg %p76
      %p233 = pneg %p73
      %p234 = scmp.lt.s32.totalorder %s20, 0
      %s235 = scalar_select %p234, %s20, 0
      %s236 = smul.addr %s235, 4
      %s237 = scalar_lea.vmem %s2, %s236
      %p238 = pneg %p102
      %p239 = pneg %p99
      %p240 = scmp.lt.s32.totalorder %s20, 0
      %s241 = scalar_select %p240, %s20, 0
      %s242 = smul.addr %s241, 4
      %s243 = scalar_lea.vmem %s3, %s242
      %p244 = pneg %p128
      %p245 = pneg %p125
      %p246 = pneg %p156
      %p247 = pneg %p153
      %p248 = scmp.lt.s32.totalorder %s19, 1
      %s249 = scalar_select %p248, %s19, 1
      %p250 = scmp.lt.s32.totalorder %s20, 0
      %s251 = scalar_select %p250, %s20, 0
      %s252 = smul.addr %s251, 2
      %s253 = smul.addr %s249, 2
      %s254 = sadd.s32 %s252, %s253
      %s255 = smul.addr %s254, 4
      %s256 = scalar_lea.vmem %s4, %s255
      %p257 = scmp.lt.s32.totalorder %s19, 1
      %s258 = scalar_select %p257, %s19, 1
      %s259 = smul.addr %s258, 2
      %s260 = smul.addr %s259, 4
      %s261 = scalar_lea.vmem %s0, %s260
      %p262 = scmp.lt.s32.totalorder %s19, 1
      %s263 = scalar_select %p262, %s19, 1
      %p264 = scmp.lt.s32.totalorder %s20, 0
      %s265 = scalar_select %p264, %s20, 0
      %s266 = smul.addr %s265, 2
      %s267 = smul.addr %s263, 2
      %s268 = sadd.s32 %s266, %s267
      %s269 = smul.addr %s268, 4
      %s270 = scalar_lea.vmem %s1, %s269
      %p271 = scmp.lt.s32.totalorder %s20, 0
      %s272 = scalar_select %p271, %s20, 0
      %s273 = smul.addr %s272, 4
      %s274 = scalar_lea.vmem %s2, %s273
      %p275 = scmp.lt.s32.totalorder %s20, 0
      %s276 = scalar_select %p275, %s20, 0
      %s277 = smul.addr %s276, 4
      %s278 = scalar_lea.vmem %s3, %s277
      %p279 = scmp.lt.s32.totalorder %s19, 1
      %s280 = scalar_select %p279, %s19, 1
      %p281 = scmp.lt.s32.totalorder %s20, 0
      %s282 = scalar_select %p281, %s20, 0
      %s283 = smul.addr %s282, 2
      %s284 = smul.addr %s280, 2
      %s285 = sadd.s32 %s283, %s284
      %s286 = smul.addr %s285, 4
      %s287 = scalar_lea.vmem %s4, %s286
      %v288 = vld [vmem:[%s261] sm:$0xff]
      %v289 = vld [vmem:[%s274] sm:$0xf]
      %v290 = vld [vmem:[%s278] sm:$0xf]
      %v291 = vld [vmem:[%s278 + $0x4] sm:$0xf]
      %v292 = vld [vmem:[%s278 + $0x8] sm:$0xf]
      %294 = vset.pattern.permute.xlu0 0
      %295 = vperm.xlu0 %294, %v289
      %v296 = vpop.permute.xlu0 %295
      %v299 = vlaneseq
      %v300 = vshrl.u32 %v299, 7
      %v301 = vsub.s32 0, %v300
      %v302 = vrot.slane %v288, %v301
      %v303 = vlaneseq
      %v304 = vshrl.u32 %v303, 7
      %v305 = vsub.s32 4, %v304
      %v306 = vrot.slane %v288, %v305
      %v309 = vlaneseq
      %v310 = vshrl.u32 %v309, 7
      %v311 = vsub.s32 0, %v310
      %v312 = vrot.slane %v302, %v311
      %v313 = vlaneseq
      %v314 = vshrl.u32 %v313, 7
      %v315 = vsub.s32 0, %v314
      %v316 = vrot.slane %v306, %v315
      %v317 = vmul.f32 %v296, %v312
      %v318 = vmul.f32 %v296, %v316
      %320 = vset.pattern.permute.xlu0 0
      %321 = vperm.xlu0 %320, %v290
      %v322 = vpop.permute.xlu0 %321
      %v324 = vadd.f32 %v322, %v317
      %v325 = vadd.f32 %v322, %v318
      %326 = vset.pattern.permute.xlu0 1
      %327 = vperm.xlu0 %326, %v289
      %v328 = vpop.permute.xlu0 %327
      %v330 = vlaneseq
      %v331 = vshrl.u32 %v330, 7
      %v332 = vsub.s32 1, %v331
      %v333 = vrot.slane %v288, %v332
      %v334 = vlaneseq
      %v335 = vshrl.u32 %v334, 7
      %v336 = vsub.s32 5, %v335
      %v337 = vrot.slane %v288, %v336
      %v340 = vlaneseq
      %v341 = vshrl.u32 %v340, 7
      %v342 = vsub.s32 1, %v341
      %v343 = vrot.slane %v333, %v342
      %v344 = vlaneseq
      %v345 = vshrl.u32 %v344, 7
      %v346 = vsub.s32 1, %v345
      %v347 = vrot.slane %v337, %v346
      %v348 = vmul.f32 %v328, %v343
      %v349 = vmul.f32 %v328, %v347
      %v350 = vadd.f32 %v324, %v348
      %v351 = vadd.f32 %v325, %v349
      %352 = vset.pattern.permute.xlu0 2
      %353 = vperm.xlu0 %352, %v289
      %v354 = vpop.permute.xlu0 %353
      %v356 = vlaneseq
      %v357 = vshrl.u32 %v356, 7
      %v358 = vsub.s32 2, %v357
      %v359 = vrot.slane %v288, %v358
      %v360 = vlaneseq
      %v361 = vshrl.u32 %v360, 7
      %v362 = vsub.s32 6, %v361
      %v363 = vrot.slane %v288, %v362
      %v366 = vlaneseq
      %v367 = vshrl.u32 %v366, 7
      %v368 = vsub.s32 2, %v367
      %v369 = vrot.slane %v359, %v368
      %v370 = vlaneseq
      %v371 = vshrl.u32 %v370, 7
      %v372 = vsub.s32 2, %v371
      %v373 = vrot.slane %v363, %v372
      %v374 = vmul.f32 %v354, %v369
      %v375 = vmul.f32 %v354, %v373
      %v376 = vadd.f32 %v350, %v374
      %v377 = vadd.f32 %v351, %v375
      %378 = vset.pattern.permute.xlu0 3
      %379 = vperm.xlu0 %378, %v289
      %v380 = vpop.permute.xlu0 %379
      %v382 = vlaneseq
      %v383 = vshrl.u32 %v382, 7
      %v384 = vsub.s32 3, %v383
      %v385 = vrot.slane %v288, %v384
      %v386 = vlaneseq
      %v387 = vshrl.u32 %v386, 7
      %v388 = vsub.s32 7, %v387
      %v389 = vrot.slane %v288, %v388
      %v392 = vlaneseq
      %v393 = vshrl.u32 %v392, 7
      %v394 = vsub.s32 3, %v393
      %v395 = vrot.slane %v385, %v394
      %v396 = vlaneseq
      %v397 = vshrl.u32 %v396, 7
      %v398 = vsub.s32 3, %v397
      %v399 = vrot.slane %v389, %v398
      %v400 = vmul.f32 %v380, %v395
      %v401 = vmul.f32 %v380, %v399
      %v402 = vadd.f32 %v376, %v400
      %v403 = vadd.f32 %v377, %v401
      %v404 = vld [vmem:[%s270] sm:$0xff]
      %v407 = vcombine.low %v402, %v403
      %v409 = vadd.f32 %v404, %v407
      %v411 = vcombine.high %v409, %v409
      %vm413 = vcmask 1043456
      %v414 = vsel %vm413, %v409, 0.0
      %v415 = vsel %vm413, %v411, 0.0
      %v416 = vadd.f32 %v414, %v415
      %417 = vadd.xlane.f32.xlu0 %v416
      %v418 = vpop.xlane.xlu0 %417
      %v419 = vmul.f32 %v418, 0.00390625
      %v422 = vunpack.c.l.s4 839922192
      %v423 = vunpack.c.0.s8 %v422
      %v424 = vlaneseq
      %v425 = vshrl.u32 %v424, 7
      %v426 = vsub.s32 %v423, %v425
      %v427 = vrot.slane %v419, %v426
      %v429 = vsub.f32 %v409, %v427
      %v430 = vmul.f32 %v429, %v429
      %v432 = vcombine.high %v430, %v430
      %v434 = vsel %vm413, %v430, 0.0
      %v435 = vsel %vm413, %v432, 0.0
      %v436 = vadd.f32 %v434, %v435
      %437 = vadd.xlane.f32.xlu0 %v436
      %v438 = vpop.xlane.xlu0 %437
      %v439 = vmul.f32 %v438, 0.00390625
      %v440 = vadd.f32 %v439, 1e-05
      %v441 = vrsqrt.pop %v440
      %v444 = vunpack.c.l.s4 839922192
      %v445 = vunpack.c.0.s8 %v444
      %v446 = vlaneseq
      %v447 = vshrl.u32 %v446, 7
      %v448 = vsub.s32 %v445, %v447
      %v449 = vrot.slane %v441, %v448
      %v451 = vmul.f32 %v429, %v449
      %453 = vset.pattern.permute.xlu0 0
      %454 = vperm.xlu0 %453, %v291
      %v455 = vpop.permute.xlu0 %454
      %v457 = vunpack.c.l.s4 839922192
      %v458 = vunpack.c.0.s8 %v457
      %v459 = vlaneseq
      %v460 = vshrl.u32 %v459, 7
      %v461 = vsub.s32 %v458, %v460
      %v462 = vrot.slane %v455, %v461
      %v464 = vmul.f32 %v451, %v462
      %466 = vset.pattern.permute.xlu0 0
      %467 = vperm.xlu0 %466, %v292
      %v468 = vpop.permute.xlu0 %467
      %v470 = vunpack.c.l.s4 839922192
      %v471 = vunpack.c.0.s8 %v470
      %v472 = vlaneseq
      %v473 = vshrl.u32 %v472, 7
      %v474 = vsub.s32 %v471, %v473
      %v475 = vrot.slane %v468, %v474
      %v477 = vadd.f32 %v464, %v475
      %v478 = vmul.f32 %v477, 0.5
      %v479 = vmul.f32 %v477, 0.70710677
      %v480 = verf.f32.pop %v479
      %v481 = vadd.f32 %v480, 1.0
      %v482 = vmul.f32 %v478, %v481
      %483 = vst [vmem:[%s287] sm:$0xff] %v482
      %p484 = scmp.lt.s32.totalorder %s19, 1
      %s485 = scalar_select %p484, %s19, 1
      %p486 = scmp.lt.s32.totalorder %s20, 0
      %s487 = scalar_select %p486, %s20, 0
      %s488 = smul.addr %s487, 2
      %s489 = smul.addr %s485, 2
      %s490 = sadd.s32 %s488, %s489
      %s491 = smul.addr %s490, 4
      %s492 = scalar_lea.vmem %s4, %s491
      // Predicated region
      $region37: #{operator_block_2d.3} parent=35 // pred_check
        %p493 = pneg %p153
      $region38: #{operator_block_2d.3} parent=35 // pred_check_branch
        %495 = sbr.rel (%p493) target = $region40
      $region39: #{operator_block_2d.3} parent=35 // pred_region
        _
      $region40: #{operator_block_2d.3} parent=35 // pred_fallthru
        _
    $region36: #{operator_block_2d.3} parent=5 // pred_fallthru
      _
    %p496 = scmp.le.s32.totalorder 2, %s10
    // Predicated region
    $region41: #{operator_block_2d.3} parent=5 // pred_check
      %p497 = pneg %p496
    $region42: #{operator_block_2d.3} parent=5 // pred_check_branch
      %499 = sbr.rel (%p497) target = $region44
    $region43: #{operator_block_2d.3} parent=5 // pred_region
      %s500 = ssub.s32 %s10, 2
      // Predicated region
      $region45: #{operator_block_2d.3} parent=43 // pred_check
        %p501 = pneg %p159
      $region46: #{operator_block_2d.3} parent=43 // pred_check_branch
        %503 = sbr.rel (%p501) target = $region48
      $region47: #{operator_block_2d.3} parent=43 // pred_region
        %p504 = scmp.lt.s32.totalorder %s21, 1
        %s505 = scalar_select %p504, %s21, 1
        %p506 = scmp.lt.s32.totalorder %s22, 0
        %s507 = scalar_select %p506, %s22, 0
        %s508 = smul.addr %s507, 2
        %s509 = smul.addr %s505, 2
        %s510 = sadd.s32 %s508, %s509
        %s511 = smul.addr %s510, 4
        %s512 = scalar_lea.vmem %s4, %s511
      $region48: #{operator_block_2d.3} parent=43 // pred_fallthru
        _
    $region44: #{operator_block_2d.3} parent=5 // pred_fallthru
      _
  $region6: #{operator_block_2d.3} parent=0 // loop_footer
    %s14 = sadd.s32 1, %s10
  $region7: #{operator_block_2d.3} parent=0 // loop_footer_branch
    %9 = sbr.rel target = $region3
  $region8: #{operator_block_2d.3} parent=0 // loop_exit
    _

</llo_original>
